<compile_context>
chip_gen: v7x
topology: tpu7x:2x2x1
jax: 0.10.0
libtpu: 0.0.40
codegen_flags: <defaults>
</compile_context>

<pallas_src>
import functools
import math

import jax
import jax.numpy as jnp
from jax import lax
from jax.experimental import pallas as pl
from jax.experimental.pallas import tpu as pltpu


# --------------------------------------------------------------------------------------
# Stage 1: fused, hoisted per-head Q/K/V projection.
#   x:(B,S,E) bf16  ->  q_scaled, k, v : (B,H,S,D) bf16   (q pre-multiplied by D**-0.5)
# --------------------------------------------------------------------------------------
def _qkv_proj_kernel(x_ref, wq_ref, wk_ref, wv_ref, bq_ref, bk_ref, bv_ref,
                     q_ref, k_ref, v_ref, *, scale):
    x = x_ref[0]                                                          # (ts, E) bf16
    q = jnp.dot(x, wq_ref[0], preferred_element_type=jnp.float32) + bq_ref[0]
    q_ref[0, 0] = (q * scale).astype(q_ref.dtype)                         # pre-scaled
    k = jnp.dot(x, wk_ref[0], preferred_element_type=jnp.float32) + bk_ref[0]
    k_ref[0, 0] = k.astype(k_ref.dtype)
    v = jnp.dot(x, wv_ref[0], preferred_element_type=jnp.float32) + bv_ref[0]
    v_ref[0, 0] = v.astype(v_ref.dtype)


def _qkv_project(x_bf16, wq, wk, wv, bq, bk, bv, *, num_heads, scale, ts):
    B, S, E = x_bf16.shape
    H = num_heads
    D = E // H
    out_sds = jax.ShapeDtypeStruct((B, H, S, D), jnp.bfloat16)
    head_w = lambda: pl.BlockSpec((1, E, D), lambda b, s, h: (h, 0, 0))
    head_b = lambda: pl.BlockSpec((1, 1, D), lambda b, s, h: (h, 0, 0))
    out_sp = lambda: pl.BlockSpec((1, 1, ts, D), lambda b, s, h: (b, h, s, 0))
    return pl.pallas_call(
        functools.partial(_qkv_proj_kernel, scale=scale),
        out_shape=(out_sds, out_sds, out_sds),
        grid=(B, S // ts, H),
        in_specs=[
            pl.BlockSpec((1, ts, E), lambda b, s, h: (b, s, 0)),   # x: resident across h
            head_w(), head_w(), head_w(),
            head_b(), head_b(), head_b(),
        ],
        out_specs=(out_sp(), out_sp(), out_sp()),
        compiler_params=pltpu.CompilerParams(
            dimension_semantics=("parallel", "parallel", "arbitrary")),
    )(x_bf16, wq, wk, wv, bq, bk, bv)


# --------------------------------------------------------------------------------------
# Stage 2: flash attention over pre-projected K/V tiles + fused output projection.
# --------------------------------------------------------------------------------------
def _flash_attn_kernel(q_ref, k_ref, v_ref, wo_ref, bo_ref, o_ref,
                       m_sc, l_sc, acc_sc, acc_o,
                       *, causal, block_q, block_kv):
    qi = pl.program_id(1)
    hg = pl.program_id(2)
    ki = pl.program_id(3)
    num_hg = pl.num_programs(2)
    num_kv = pl.num_programs(3)

    # Zero the output-projection accumulator once per (batch, q-block).
    @pl.when((hg == 0) & (ki == 0))
    def _():
        acc_o[...] = jnp.zeros(acc_o.shape, acc_o.dtype)

    # Reset the online-softmax state at the start of each head-group's kv sweep.
    @pl.when(ki == 0)
    def _():
        m_sc[...] = jnp.full(m_sc.shape, -jnp.inf, m_sc.dtype)
        l_sc[...] = jnp.zeros(l_sc.shape, l_sc.dtype)
        acc_sc[...] = jnp.zeros(acc_sc.shape, acc_sc.dtype)

    def scores():
        # (G,tq,D) x (G,tk,D) -> (G,tq,tk), bf16 MXU inputs, f32 accumulation.
        return jnp.einsum('gqd,gkd->gqk', q_ref[0], k_ref[0],
                          preferred_element_type=jnp.float32)

    def update(s):
        m_prev = m_sc[...]
        m_new = jnp.maximum(m_prev, jnp.max(s, axis=-1, keepdims=True))
        alpha = jnp.exp(m_prev - m_new)
        p = jnp.exp(s - m_new)
        l_sc[...] = alpha * l_sc[...] + jnp.sum(p, axis=-1, keepdims=True)
        acc_sc[...] = alpha * acc_sc[...] + jnp.einsum(
            'gqk,gkd->gqd', p.astype(jnp.bfloat16), v_ref[0],
            preferred_element_type=jnp.float32)
        m_sc[...] = m_new

    if causal:
        q_lo = qi * block_q
        q_hi = q_lo + (block_q - 1)
        k_lo = ki * block_kv
        k_hi = k_lo + (block_kv - 1)

        # Fully below the diagonal: fast path, no mask built (review #8).
        @pl.when(k_hi <= q_lo)
        def _():
            update(scores())

        # Straddling the diagonal: build and apply the mask.
        @pl.when((k_hi > q_lo) & (k_lo <= q_hi))
        def _():
            s = scores()
            row = q_lo + lax.broadcasted_iota(jnp.int32, s.shape, 1)
            col = k_lo + lax.broadcasted_iota(jnp.int32, s.shape, 2)
            update(jnp.where(col > row, -jnp.inf, s))
        # Fully above the diagonal: no compute; DMA also elided by the clamped
        # k/v index_map (review #7).
    else:
        update(scores())

    # End of this head-group's kv sweep: normalize and fold directly into the
    # output projection accumulator (no (S, E) head concat ever materialized).
    @pl.when(ki == num_kv - 1)
    def _():
        inv_l = pl.reciprocal(l_sc[...], approx=True)                 # EUP, off VALU
        head_out = (acc_sc[...] * inv_l).astype(jnp.bfloat16)         # (G, tq, D)
        part = jnp.einsum('gqd,gde->gqe', head_out, wo_ref[0],
                          preferred_element_type=jnp.float32)         # (G, tq, E)
        acc_o[...] += jnp.sum(part, axis=0)

    # Very last step for this (batch, q-block): add out-proj bias, store lane-dense E.
    @pl.when((hg == num_hg - 1) & (ki == num_kv - 1))
    def _():
        o_ref[0] = (acc_o[...] + bo_ref[...]).astype(o_ref.dtype)


# --------------------------------------------------------------------------------------
# Wrapper
# --------------------------------------------------------------------------------------
def self_attention(x, params, *, num_heads, causal_mask=False,
                   block_q=256, block_kv=256, proj_block=256, heads_per_step=None):
    """x: (B, S, E). params: PyTorch-layout (out,in) weights, (E,) biases."""
    B, S, E = x.shape
    H = num_heads
    if E % H:
        raise ValueError("embed_dim must be divisible by num_heads")
    D = E // H
    G = H if heads_per_step is None else heads_per_step   # heads packed per grid step
    if H % G:
        raise ValueError("num_heads must be divisible by heads_per_step")
    HG = H // G
    tq = min(block_q, S)
    tkv = min(block_kv, S)
    ts = min(proj_block, S)
    if S % tq or S % tkv or S % ts:
        raise ValueError("seq_len must be divisible by the q/kv/proj block sizes")

    # One-time wrapper-side re-layout: PyTorch (out,in) -> per-head pre-transposed bf16.
    def per_head_in(w):   # (E,E) -> (H,E,D):  x @ slab_h == (x @ W.T)[:, h*D:(h+1)*D]
        return jnp.swapaxes(w.reshape(H, D, E), 1, 2).astype(jnp.bfloat16)

    wq = per_head_in(params["wq"])
    wk = per_head_in(params["wk"])
    wv = per_head_in(params["wv"])
    bq = params["bq"].reshape(H, 1, D).astype(jnp.float32)
    bk = params["bk"].reshape(H, 1, D).astype(jnp.float32)
    bv = params["bv"].reshape(H, 1, D).astype(jnp.float32)
    # out-proj: sum_h o_h @ Wo_h == concat_h(o_h) @ Wo.T ; Wo_h = Wo[:, h*D:(h+1)*D].T
    wo = jnp.transpose(params["wo"].reshape(E, H, D), (1, 2, 0))       # (H, D, E)
    wo = wo.reshape(HG, G, D, E).astype(jnp.bfloat16)
    bo = params["bo"].reshape(1, E).astype(jnp.float32)

    # ---- Stage 1: hoisted per-head Q/K/V projection (q pre-scaled, bf16). ----
    q, k, v = _qkv_project(x.astype(jnp.bfloat16), wq, wk, wv, bq, bk, bv,
                           num_heads=H, scale=D ** (-0.5), ts=ts)

    # ---- Stage 2: flash attention + fused output projection. ----
    kernel = functools.partial(_flash_attn_kernel, causal=causal_mask,
                               block_q=tq, block_kv=tkv)
    grid = (B, S // tq, HG, S // tkv)

    if causal_mask:
        # Clamp kv block index so fully-masked blocks repeat the last needed block
        # index -> the pipeline elides their DMA entirely.
        def kv_map(b, qi, hg, ki):
            last_needed = (qi * tq + (tq - 1)) // tkv
            return (b, hg, jnp.minimum(ki, last_needed), 0)
    else:
        def kv_map(b, qi, hg, ki):
            return (b, hg, ki, 0)

    kv_spec = lambda: pl.BlockSpec((1, G, tkv, D), kv_map,
                                   pipeline_mode=pl.Buffered(3))

    return pl.pallas_call(
        kernel,
        out_shape=jax.ShapeDtypeStruct((B, S, E), x.dtype),
        grid=grid,
        in_specs=[
            pl.BlockSpec((1, G, tq, D), lambda b, qi, hg, ki: (b, hg, qi, 0)),   # q (resident over kv)
            kv_spec(),                                                           # k tiles (streamed)
            kv_spec(),                                                           # v tiles (streamed)
            pl.BlockSpec((1, G, D, E), lambda b, qi, hg, ki: (hg, 0, 0, 0)),     # wo group slab
            pl.BlockSpec((1, E), lambda b, qi, hg, ki: (0, 0)),                  # bo
        ],
        out_specs=pl.BlockSpec((1, tq, E), lambda b, qi, hg, ki: (b, qi, 0)),
        scratch_shapes=[
            pltpu.VMEM((G, tq, 1), jnp.float32),    # running max
            pltpu.VMEM((G, tq, 1), jnp.float32),    # running sum
            pltpu.VMEM((G, tq, D), jnp.float32),    # per-head attention accumulator
            pltpu.VMEM((tq, E), jnp.float32),       # output-projection accumulator
        ],
        compiler_params=pltpu.CompilerParams(
            dimension_semantics=("parallel", "parallel", "arbitrary", "arbitrary"),
            # 48 MiB fits every generation (v7x has 64 MiB/TC); re-derive if E or the
            # block sizes are scaled up for v5e/v6e (128 MiB VMEM).
            vmem_limit_bytes=48 * 1024 * 1024),
    )(q, k, v, wo, bo)


def init_params(key, embed_dim):
    """Deterministic xavier_uniform weights (PyTorch (out,in) layout), zero biases."""
    bound = math.sqrt(6.0 / (embed_dim + embed_dim))
    ks = jax.random.split(key, 4)

    def w(k):
        return jax.random.uniform(k, (embed_dim, embed_dim), jnp.float32,
                                  minval=-bound, maxval=bound)

    zeros = jnp.zeros((embed_dim,), jnp.float32)
    return dict(wq=w(ks[0]), bq=zeros, wk=w(ks[1]), bk=zeros,
                wv=w(ks[2]), bv=zeros, wo=w(ks[3]), bo=zeros)


def self_attention_reference(x, params, *, num_heads, causal_mask=False):
    """Pure-JAX f32 reference mirroring the PyTorch forward."""
    B, S, E = x.shape
    D = E // num_heads
    q = x @ params["wq"].T + params["bq"]
    k = x @ params["wk"].T + params["bk"]
    v = x @ params["wv"].T + params["bv"]

    def split(t):
        return t.reshape(B, S, num_heads, D).transpose(0, 2, 1, 3)   # (B, H, S, D)

    q, k, v = map(split, (q, k, v))
    attn = (q * D ** -0.5) @ k.transpose(0, 1, 3, 2)                 # (B, H, S, S)
    if causal_mask:
        mask = jnp.triu(jnp.ones((S, S), bool), k=1)
        attn = jnp.where(mask, -jnp.inf, attn)
    attn = jax.nn.softmax(attn, axis=-1)
    out = (attn @ v).transpose(0, 2, 1, 3).reshape(B, S, E)
    return out @ params["wo"].T + params["bo"]


if __name__ == "__main__":
    # Small but lane/tile-friendly shapes: batch=2, seq=256, embed=256, heads=8 (head_dim=32).
    B, S, E, H = 2, 256, 256, 8
    key = jax.random.PRNGKey(0)
    kx, kp = jax.random.split(key)
    x = jax.random.normal(kx, (B, S, E), jnp.float32)
    params = init_params(kp, E)

    # bf16 MXU inputs + approx reciprocal -> compare against the exact f32 reference with a
    # correspondingly relaxed tolerance (errors are ~1e-3; garbage would be ~1e-1+).
    TOL = 3e-2

    out = jax.block_until_ready(self_attention(x, params, num_heads=H, causal_mask=False))
    ref = self_attention_reference(x, params, num_heads=H, causal_mask=False)
    assert out.shape == (B, S, E)
    err = float(jnp.max(jnp.abs(out - ref)))
    assert err < TOL, f"mismatch vs reference: max abs err {err}"

    out_c = jax.block_until_ready(self_attention(x, params, num_heads=H, causal_mask=True))
    ref_c = self_attention_reference(x, params, num_heads=H, causal_mask=True)
    err_c = float(jnp.max(jnp.abs(out_c - ref_c)))
    assert err_c < TOL, f"causal mismatch: max abs err {err_c}"

    # Exercise the general tiled path too (multiple q/kv blocks, head grouping, causal
    # DMA-skip via the clamped index_map).
    out_t = jax.block_until_ready(self_attention(
        x, params, num_heads=H, causal_mask=True,
        block_q=128, block_kv=128, heads_per_step=4))
    err_t = float(jnp.max(jnp.abs(out_t - ref_c)))
    assert err_t < TOL, f"tiled causal mismatch: max abs err {err_t}"

    # TODO(synk): nn.Dropout(p=0.0) is the identity; nonzero-p dropout RNG is not implemented.
    print("KERNEL_OK")
</pallas_src>

<mosaic_0001>
module attributes {stable_mosaic.version = 11 : i64} {
  func.func @_qkv_proj_kernel(%arg0: i32, %arg1: i32, %arg2: i32, %arg3: memref<1x256x256xbf16, #tpu.memory_space<vmem>>, %arg4: memref<1x256x32xbf16, #tpu.memory_space<vmem>>, %arg5: memref<1x256x32xbf16, #tpu.memory_space<vmem>>, %arg6: memref<1x256x32xbf16, #tpu.memory_space<vmem>>, %arg7: memref<1x1x32xf32, #tpu.memory_space<vmem>>, %arg8: memref<1x1x32xf32, #tpu.memory_space<vmem>>, %arg9: memref<1x1x32xf32, #tpu.memory_space<vmem>>, %arg10: memref<1x1x256x32xbf16, #tpu.memory_space<vmem>>, %arg11: memref<1x1x256x32xbf16, #tpu.memory_space<vmem>>, %arg12: memref<1x1x256x32xbf16, #tpu.memory_space<vmem>>) attributes {dimension_semantics = [#tpu.dimension_semantics<parallel>, #tpu.dimension_semantics<parallel>, #tpu.dimension_semantics<arbitrary>], iteration_bounds = array<i64: 2, 1, 8>, scalar_prefetch = 0 : i64, scratch_operands = 0 : i64, tpu.core_type = #tpu.core_type<tc>, window_params = [{transform_indices = @transform_0, window_bounds = array<i64: 1, 256, 256>}, {transform_indices = @transform_1, window_bounds = array<i64: 1, 256, 32>}, {transform_indices = @transform_2, window_bounds = array<i64: 1, 256, 32>}, {transform_indices = @transform_3, window_bounds = array<i64: 1, 256, 32>}, {transform_indices = @transform_4, window_bounds = array<i64: 1, 1, 32>}, {transform_indices = @transform_5, window_bounds = array<i64: 1, 1, 32>}, {transform_indices = @transform_6, window_bounds = array<i64: 1, 1, 32>}, {transform_indices = @transform_7, window_bounds = array<i64: 1, 1, 256, 32>}, {transform_indices = @transform_8, window_bounds = array<i64: 1, 1, 256, 32>}, {transform_indices = @transform_9, window_bounds = array<i64: 1, 1, 256, 32>}]} {
    %c0 = arith.constant 0 : index
    %c0_0 = arith.constant 0 : index
    %c0_1 = arith.constant 0 : index
    %0 = vector.load %arg3[%c0, %c0_0, %c0_1] : memref<1x256x256xbf16, #tpu.memory_space<vmem>>, vector<1x256x256xbf16>
    %1 = vector.shape_cast %0 : vector<1x256x256xbf16> to vector<256x256xbf16>
    %c0_2 = arith.constant 0 : index
    %c0_3 = arith.constant 0 : index
    %c0_4 = arith.constant 0 : index
    %2 = vector.load %arg4[%c0_2, %c0_3, %c0_4] : memref<1x256x32xbf16, #tpu.memory_space<vmem>>, vector<1x256x32xbf16>
    %3 = vector.shape_cast %2 : vector<1x256x32xbf16> to vector<256x32xbf16>
    %cst = arith.constant dense<0.000000e+00> : vector<256x32xf32>
    %4 = tpu.matmul %1, %3, %cst {dimension_numbers = #tpu.dot_dimension_numbers<[1], [0], [0], [1], [0, 0, 1, 1], [], []>} : vector<256x256xbf16>, vector<256x32xbf16>, vector<256x32xf32> -> vector<256x32xf32>
    %c0_5 = arith.constant 0 : index
    %c0_6 = arith.constant 0 : index
    %c0_7 = arith.constant 0 : index
    %5 = vector.load %arg7[%c0_5, %c0_6, %c0_7] : memref<1x1x32xf32, #tpu.memory_space<vmem>>, vector<1x1x32xf32>
    %6 = vector.shape_cast %5 : vector<1x1x32xf32> to vector<1x32xf32>
    %7 = vector.broadcast %6 : vector<1x32xf32> to vector<256x32xf32>
    %8 = arith.addf %4, %7 : vector<256x32xf32>
    %cst_8 = arith.constant 0.176776692 : f32
    %9 = vector.broadcast %cst_8 : f32 to vector<256x32xf32>
    %10 = arith.mulf %8, %9 : vector<256x32xf32>
    %11 = arith.truncf %10 : vector<256x32xf32> to vector<256x32xbf16>
    %c0_9 = arith.constant 0 : index
    %c0_10 = arith.constant 0 : index
    %c0_11 = arith.constant 0 : index
    %c0_12 = arith.constant 0 : index
    %12 = vector.load %arg10[%c0_9, %c0_10, %c0_11, %c0_12] : memref<1x1x256x32xbf16, #tpu.memory_space<vmem>>, vector<1x1x256x32xbf16>
    %13 = vector.shape_cast %12 : vector<1x1x256x32xbf16> to vector<256x32xbf16>
    %14 = vector.shape_cast %11 : vector<256x32xbf16> to vector<1x1x256x32xbf16>
    tpu.vector_store %arg10[%c0_9, %c0_10, %c0_11, %c0_12], %14 {strides = array<i32>} : memref<1x1x256x32xbf16, #tpu.memory_space<vmem>>, vector<1x1x256x32xbf16>,
    %c0_13 = arith.constant 0 : index
    %c0_14 = arith.constant 0 : index
    %c0_15 = arith.constant 0 : index
    %15 = vector.load %arg5[%c0_13, %c0_14, %c0_15] : memref<1x256x32xbf16, #tpu.memory_space<vmem>>, vector<1x256x32xbf16>
    %16 = vector.shape_cast %15 : vector<1x256x32xbf16> to vector<256x32xbf16>
    %cst_16 = arith.constant dense<0.000000e+00> : vector<256x32xf32>
    %17 = tpu.matmul %1, %16, %cst_16 {dimension_numbers = #tpu.dot_dimension_numbers<[1], [0], [0], [1], [0, 0, 1, 1], [], []>} : vector<256x256xbf16>, vector<256x32xbf16>, vector<256x32xf32> -> vector<256x32xf32>
    %c0_17 = arith.constant 0 : index
    %c0_18 = arith.constant 0 : index
    %c0_19 = arith.constant 0 : index
    %18 = vector.load %arg8[%c0_17, %c0_18, %c0_19] : memref<1x1x32xf32, #tpu.memory_space<vmem>>, vector<1x1x32xf32>
    %19 = vector.shape_cast %18 : vector<1x1x32xf32> to vector<1x32xf32>
    %20 = vector.broadcast %19 : vector<1x32xf32> to vector<256x32xf32>
    %21 = arith.addf %17, %20 : vector<256x32xf32>
    %22 = arith.truncf %21 : vector<256x32xf32> to vector<256x32xbf16>
    %c0_20 = arith.constant 0 : index
    %c0_21 = arith.constant 0 : index
    %c0_22 = arith.constant 0 : index
    %c0_23 = arith.constant 0 : index
    %23 = vector.load %arg11[%c0_20, %c0_21, %c0_22, %c0_23] : memref<1x1x256x32xbf16, #tpu.memory_space<vmem>>, vector<1x1x256x32xbf16>
    %24 = vector.shape_cast %23 : vector<1x1x256x32xbf16> to vector<256x32xbf16>
    %25 = vector.shape_cast %22 : vector<256x32xbf16> to vector<1x1x256x32xbf16>
    tpu.vector_store %arg11[%c0_20, %c0_21, %c0_22, %c0_23], %25 {strides = array<i32>} : memref<1x1x256x32xbf16, #tpu.memory_space<vmem>>, vector<1x1x256x32xbf16>,
    %c0_24 = arith.constant 0 : index
    %c0_25 = arith.constant 0 : index
    %c0_26 = arith.constant 0 : index
    %26 = vector.load %arg6[%c0_24, %c0_25, %c0_26] : memref<1x256x32xbf16, #tpu.memory_space<vmem>>, vector<1x256x32xbf16>
    %27 = vector.shape_cast %26 : vector<1x256x32xbf16> to vector<256x32xbf16>
    %cst_27 = arith.constant dense<0.000000e+00> : vector<256x32xf32>
    %28 = tpu.matmul %1, %27, %cst_27 {dimension_numbers = #tpu.dot_dimension_numbers<[1], [0], [0], [1], [0, 0, 1, 1], [], []>} : vector<256x256xbf16>, vector<256x32xbf16>, vector<256x32xf32> -> vector<256x32xf32>
    %c0_28 = arith.constant 0 : index
    %c0_29 = arith.constant 0 : index
    %c0_30 = arith.constant 0 : index
    %29 = vector.load %arg9[%c0_28, %c0_29, %c0_30] : memref<1x1x32xf32, #tpu.memory_space<vmem>>, vector<1x1x32xf32>
    %30 = vector.shape_cast %29 : vector<1x1x32xf32> to vector<1x32xf32>
    %31 = vector.broadcast %30 : vector<1x32xf32> to vector<256x32xf32>
    %32 = arith.addf %28, %31 : vector<256x32xf32>
    %33 = arith.truncf %32 : vector<256x32xf32> to vector<256x32xbf16>
    %c0_31 = arith.constant 0 : index
    %c0_32 = arith.constant 0 : index
    %c0_33 = arith.constant 0 : index
    %c0_34 = arith.constant 0 : index
    %34 = vector.load %arg12[%c0_31, %c0_32, %c0_33, %c0_34] : memref<1x1x256x32xbf16, #tpu.memory_space<vmem>>, vector<1x1x256x32xbf16>
    %35 = vector.shape_cast %34 : vector<1x1x256x32xbf16> to vector<256x32xbf16>
    %36 = vector.shape_cast %33 : vector<256x32xbf16> to vector<1x1x256x32xbf16>
    tpu.vector_store %arg12[%c0_31, %c0_32, %c0_33, %c0_34], %36 {strides = array<i32>} : memref<1x1x256x32xbf16, #tpu.memory_space<vmem>>, vector<1x1x256x32xbf16>,
    return
  }
  func.func @transform_0(%arg0: i32, %arg1: i32, %arg2: i32) -> (i32, i32, i32) {
    %c0_i32 = arith.constant 0 : i32
    %c0_i32_0 = arith.constant 0 : i32
    return %arg0, %arg1, %c0_i32 : i32, i32, i32
  }
  func.func @transform_1(%arg0: i32, %arg1: i32, %arg2: i32) -> (i32, i32, i32) {
    %c0_i32 = arith.constant 0 : i32
    %c0_i32_0 = arith.constant 0 : i32
    %c0_i32_1 = arith.constant 0 : i32
    return %arg2, %c0_i32, %c0_i32_0 : i32, i32, i32
  }
  func.func @transform_2(%arg0: i32, %arg1: i32, %arg2: i32) -> (i32, i32, i32) {
    %c0_i32 = arith.constant 0 : i32
    %c0_i32_0 = arith.constant 0 : i32
    %c0_i32_1 = arith.constant 0 : i32
    return %arg2, %c0_i32, %c0_i32_0 : i32, i32, i32
  }
  func.func @transform_3(%arg0: i32, %arg1: i32, %arg2: i32) -> (i32, i32, i32) {
    %c0_i32 = arith.constant 0 : i32
    %c0_i32_0 = arith.constant 0 : i32
    %c0_i32_1 = arith.constant 0 : i32
    return %arg2, %c0_i32, %c0_i32_0 : i32, i32, i32
  }
  func.func @transform_4(%arg0: i32, %arg1: i32, %arg2: i32) -> (i32, i32, i32) {
    %c0_i32 = arith.constant 0 : i32
    %c0_i32_0 = arith.constant 0 : i32
    %c0_i32_1 = arith.constant 0 : i32
    return %arg2, %c0_i32, %c0_i32_0 : i32, i32, i32
  }
  func.func @transform_5(%arg0: i32, %arg1: i32, %arg2: i32) -> (i32, i32, i32) {
    %c0_i32 = arith.constant 0 : i32
    %c0_i32_0 = arith.constant 0 : i32
    %c0_i32_1 = arith.constant 0 : i32
    return %arg2, %c0_i32, %c0_i32_0 : i32, i32, i32
  }
  func.func @transform_6(%arg0: i32, %arg1: i32, %arg2: i32) -> (i32, i32, i32) {
    %c0_i32 = arith.constant 0 : i32
    %c0_i32_0 = arith.constant 0 : i32
    %c0_i32_1 = arith.constant 0 : i32
    return %arg2, %c0_i32, %c0_i32_0 : i32, i32, i32
  }
  func.func @transform_7(%arg0: i32, %arg1: i32, %arg2: i32) -> (i32, i32, i32, i32) {
    %c0_i32 = arith.constant 0 : i32
    %c0_i32_0 = arith.constant 0 : i32
    return %arg0, %arg2, %arg1, %c0_i32 : i32, i32, i32, i32
  }
  func.func @transform_8(%arg0: i32, %arg1: i32, %arg2: i32) -> (i32, i32, i32, i32) {
    %c0_i32 = arith.constant 0 : i32
    %c0_i32_0 = arith.constant 0 : i32
    return %arg0, %arg2, %arg1, %c0_i32 : i32, i32, i32, i32
  }
  func.func @transform_9(%arg0: i32, %arg1: i32, %arg2: i32) -> (i32, i32, i32, i32) {
    %c0_i32 = arith.constant 0 : i32
    %c0_i32_0 = arith.constant 0 : i32
    return %arg0, %arg2, %arg1, %c0_i32 : i32, i32, i32, i32
  }
}

</mosaic_0001>

<llo_original>
// kernel: tpu_custom_call.1
$region0: #{tpu_custom_call.1}
  #allocation0 [shape = 'u32[]', space=smem, size = 0x4, offset = 0x4, fixed_abs, tag = 'smem constant byte address 0x4 - core index']
  #allocation1 [shape = 'u32[144,128]{1,0:T(1,128)}', space=vmem, size = 0x12000, scoped, tag = 'internal scratch']
  %s0 = inlined_call_operand.vmem [shape: bf16[2,256,256], index: 0, kind: input, shape index: {}]
  %s1 = inlined_call_operand.vmem [shape: bf16[8,256,32], index: 1, kind: input, shape index: {}]
  %s2 = inlined_call_operand.vmem [shape: bf16[8,256,32], index: 2, kind: input, shape index: {}]
  %s3 = inlined_call_operand.vmem [shape: bf16[8,256,32], index: 3, kind: input, shape index: {}]
  %s4 = inlined_call_operand.vmem [shape: f32[8,1,32], index: 4, kind: input, shape index: {}]
  %s5 = inlined_call_operand.vmem [shape: f32[8,1,32], index: 5, kind: input, shape index: {}]
  %s6 = inlined_call_operand.vmem [shape: f32[8,1,32], index: 6, kind: input, shape index: {}]
  %s7 = inlined_call_operand.vmem [shape: bf16[2,8,256,32], index: 7, kind: output, shape index: {0}]
  %s8 = inlined_call_operand.vmem [shape: bf16[2,8,256,32], index: 8, kind: output, shape index: {1}]
  %s9 = inlined_call_operand.vmem [shape: bf16[2,8,256,32], index: 9, kind: output, shape index: {2}]
  %10 = xla_tuple %s7, %s8, %s9
  %s11 = sld [smem:[#allocation0]]
  $region77: #{tpu_custom_call.1} parent=0
    _
  %s13 = ssub.s32 1, %s11
  %s14 = scalar_select 0, %s13, %s11
  loop: start=0, step=1, limit=18
  $region2: #{tpu_custom_call.1} parent=0 // loop_pre_header
    _
  $region3: #{tpu_custom_call.1} parent=0 // loop_header
    %s16 = sphi 0, %s20
    %p17 = scmp.ge.s32.totalorder %s16, 18
    %s23 = sphi 0, %s42
    %s24 = sphi 0, %s38
    %s25 = sphi 0, %s34
    %s26 = sphi 0, %s23
    %s27 = sphi 0, %s24
    %s28 = sphi 0, %s25
    %s29 = sphi 0, %s26
    %s30 = sphi 0, %s27
    %s31 = sphi 0, %s28
    %s47 = sphi 0, %s49
    %s50 = sphi 0, %s47
    %s51 = sphi 0, %s50
    %s67 = sphi 0, %s51
    %s73 = sphi 0, %s75
    %s76 = sphi 0, %s73
    %s77 = sphi 0, %s76
    %s93 = sphi 0, %s77
    %s99 = sphi 0, %s101
    %s102 = sphi 0, %s99
    %s103 = sphi 0, %s102
    %s119 = sphi 0, %s103
    %s125 = sphi 0, %s127
    %s128 = sphi 0, %s125
    %s129 = sphi 0, %s128
    %s145 = sphi 0, %s129
    %s151 = sphi 0, %s153
    %s154 = sphi 0, %s151
    %s155 = sphi 0, %s154
    %s171 = sphi 0, %s155
    %s177 = sphi 0, %s179
    %s180 = sphi 0, %s177
    %s181 = sphi 0, %s180
    %s197 = sphi 0, %s181
    %s203 = sphi 0, %s205
    %s206 = sphi 0, %s203
    %s207 = sphi 0, %s206
    %s223 = sphi 0, %s207
    %s233 = sphi 0, %s235
    %s236 = sphi 0, %s233
    %s237 = sphi 0, %s236
    %s253 = sphi 0, %s237
    %s263 = sphi 0, %s265
    %s266 = sphi 0, %s263
    %s267 = sphi 0, %s266
    %s283 = sphi 0, %s267
    %s293 = sphi 0, %s295
    %s296 = sphi 0, %s293
    %s297 = sphi 0, %s296
    %s313 = sphi 0, %s297
  $region4: #{tpu_custom_call.1} parent=0 // loop_header_branch
    %19 = sbr.rel (%p17) target = $region8
  $region5: #{tpu_custom_call.1} parent=0 // loop_body
    %s21 = ssub.s32 %s16, 1
    %s22 = ssub.s32 %s16, 2
    %s32 = sadd.s32 1, %s25
    %p33 = scmp.ge.s32.totalorder %s32, 8
    %s34 = scalar_select %p33, 0, %s32
    %s35 = sadd.s32 1, %s24
    %s36 = scalar_select %p33, %s35, %s24
    %p37 = scmp.ge.s32.totalorder %s36, 1
    %s38 = scalar_select %p37, 0, %s36
    %s39 = sadd.s32 1, %s23
    %s40 = scalar_select %p37, %s39, %s23
    %p41 = scmp.ge.s32.totalorder %s40, 2
    %s42 = scalar_select %p41, 0, %s40
    %s43 = ssub.s32 %s23, %s42
    %s44 = ssub.s32 %s24, %s38
    %s45 = sor.u32 %s43, %s44
    %p46 = scmp.eq.s32.totalorder %s45, 0
    %s48 = sadd.s32 %s47, 1
    %s49 = scalar_select %p46, %s47, %s48
    %p52 = pneg %p46
    %p53 = scmp.eq.s32.totalorder %s16, 15
    %p54 = por %p52, %p53
    %p55 = scmp.ne.s32.totalorder %s47, %s50
    %p56 = scmp.eq.s32.totalorder %s16, 0
    %p57 = por %p55, %p56
    %p58 = scmp.ne.s32.totalorder %s47, %s50
    %p59 = scmp.eq.s32.totalorder %s21, 15
    %p60 = por %p58, %p59
    %p61 = scmp.ne.s32.totalorder %s50, %s51
    %p62 = scmp.eq.s32.totalorder %s21, 0
    %p63 = por %p61, %p62
    %p64 = scmp.ne.s32.totalorder %s50, %s51
    %p65 = scmp.eq.s32.totalorder %s22, 15
    %p66 = por %p64, %p65
    %p68 = scmp.ne.s32.totalorder %s51, %s67
    %p69 = scmp.eq.s32.totalorder %s22, 0
    %p70 = por %p68, %p69
    %s71 = ssub.s32 %s25, %s34
    %p72 = scmp.eq.s32.totalorder %s71, 0
    %s74 = sadd.s32 %s73, 1
    %s75 = scalar_select %p72, %s73, %s74
    %p78 = pneg %p72
    %p79 = scmp.eq.s32.totalorder %s16, 15
    %p80 = por %p78, %p79
    %p81 = scmp.ne.s32.totalorder %s73, %s76
    %p82 = scmp.eq.s32.totalorder %s16, 0
    %p83 = por %p81, %p82
    %p84 = scmp.ne.s32.totalorder %s73, %s76
    %p85 = scmp.eq.s32.totalorder %s21, 15
    %p86 = por %p84, %p85
    %p87 = scmp.ne.s32.totalorder %s76, %s77
    %p88 = scmp.eq.s32.totalorder %s21, 0
    %p89 = por %p87, %p88
    %p90 = scmp.ne.s32.totalorder %s76, %s77
    %p91 = scmp.eq.s32.totalorder %s22, 15
    %p92 = por %p90, %p91
    %p94 = scmp.ne.s32.totalorder %s77, %s93
    %p95 = scmp.eq.s32.totalorder %s22, 0
    %p96 = por %p94, %p95
    %s97 = ssub.s32 %s25, %s34
    %p98 = scmp.eq.s32.totalorder %s97, 0
    %s100 = sadd.s32 %s99, 1
    %s101 = scalar_select %p98, %s99, %s100
    %p104 = pneg %p98
    %p105 = scmp.eq.s32.totalorder %s16, 15
    %p106 = por %p104, %p105
    %p107 = scmp.ne.s32.totalorder %s99, %s102
    %p108 = scmp.eq.s32.totalorder %s16, 0
    %p109 = por %p107, %p108
    %p110 = scmp.ne.s32.totalorder %s99, %s102
    %p111 = scmp.eq.s32.totalorder %s21, 15
    %p112 = por %p110, %p111
    %p113 = scmp.ne.s32.totalorder %s102, %s103
    %p114 = scmp.eq.s32.totalorder %s21, 0
    %p115 = por %p113, %p114
    %p116 = scmp.ne.s32.totalorder %s102, %s103
    %p117 = scmp.eq.s32.totalorder %s22, 15
    %p118 = por %p116, %p117
    %p120 = scmp.ne.s32.totalorder %s103, %s119
    %p121 = scmp.eq.s32.totalorder %s22, 0
    %p122 = por %p120, %p121
    %s123 = ssub.s32 %s25, %s34
    %p124 = scmp.eq.s32.totalorder %s123, 0
    %s126 = sadd.s32 %s125, 1
    %s127 = scalar_select %p124, %s125, %s126
    %p130 = pneg %p124
    %p131 = scmp.eq.s32.totalorder %s16, 15
    %p132 = por %p130, %p131
    %p133 = scmp.ne.s32.totalorder %s125, %s128
    %p134 = scmp.eq.s32.totalorder %s16, 0
    %p135 = por %p133, %p134
    %p136 = scmp.ne.s32.totalorder %s125, %s128
    %p137 = scmp.eq.s32.totalorder %s21, 15
    %p138 = por %p136, %p137
    %p139 = scmp.ne.s32.totalorder %s128, %s129
    %p140 = scmp.eq.s32.totalorder %s21, 0
    %p141 = por %p139, %p140
    %p142 = scmp.ne.s32.totalorder %s128, %s129
    %p143 = scmp.eq.s32.totalorder %s22, 15
    %p144 = por %p142, %p143
    %p146 = scmp.ne.s32.totalorder %s129, %s145
    %p147 = scmp.eq.s32.totalorder %s22, 0
    %p148 = por %p146, %p147
    %s149 = ssub.s32 %s25, %s34
    %p150 = scmp.eq.s32.totalorder %s149, 0
    %s152 = sadd.s32 %s151, 1
    %s153 = scalar_select %p150, %s151, %s152
    %p156 = pneg %p150
    %p157 = scmp.eq.s32.totalorder %s16, 15
    %p158 = por %p156, %p157
    %p159 = scmp.ne.s32.totalorder %s151, %s154
    %p160 = scmp.eq.s32.totalorder %s16, 0
    %p161 = por %p159, %p160
    %p162 = scmp.ne.s32.totalorder %s151, %s154
    %p163 = scmp.eq.s32.totalorder %s21, 15
    %p164 = por %p162, %p163
    %p165 = scmp.ne.s32.totalorder %s154, %s155
    %p166 = scmp.eq.s32.totalorder %s21, 0
    %p167 = por %p165, %p166
    %p168 = scmp.ne.s32.totalorder %s154, %s155
    %p169 = scmp.eq.s32.totalorder %s22, 15
    %p170 = por %p168, %p169
    %p172 = scmp.ne.s32.totalorder %s155, %s171
    %p173 = scmp.eq.s32.totalorder %s22, 0
    %p174 = por %p172, %p173
    %s175 = ssub.s32 %s25, %s34
    %p176 = scmp.eq.s32.totalorder %s175, 0
    %s178 = sadd.s32 %s177, 1
    %s179 = scalar_select %p176, %s177, %s178
    %p182 = pneg %p176
    %p183 = scmp.eq.s32.totalorder %s16, 15
    %p184 = por %p182, %p183
    %p185 = scmp.ne.s32.totalorder %s177, %s180
    %p186 = scmp.eq.s32.totalorder %s16, 0
    %p187 = por %p185, %p186
    %p188 = scmp.ne.s32.totalorder %s177, %s180
    %p189 = scmp.eq.s32.totalorder %s21, 15
    %p190 = por %p188, %p189
    %p191 = scmp.ne.s32.totalorder %s180, %s181
    %p192 = scmp.eq.s32.totalorder %s21, 0
    %p193 = por %p191, %p192
    %p194 = scmp.ne.s32.totalorder %s180, %s181
    %p195 = scmp.eq.s32.totalorder %s22, 15
    %p196 = por %p194, %p195
    %p198 = scmp.ne.s32.totalorder %s181, %s197
    %p199 = scmp.eq.s32.totalorder %s22, 0
    %p200 = por %p198, %p199
    %s201 = ssub.s32 %s25, %s34
    %p202 = scmp.eq.s32.totalorder %s201, 0
    %s204 = sadd.s32 %s203, 1
    %s205 = scalar_select %p202, %s203, %s204
    %p208 = pneg %p202
    %p209 = scmp.eq.s32.totalorder %s16, 15
    %p210 = por %p208, %p209
    %p211 = scmp.ne.s32.totalorder %s203, %s206
    %p212 = scmp.eq.s32.totalorder %s16, 0
    %p213 = por %p211, %p212
    %p214 = scmp.ne.s32.totalorder %s203, %s206
    %p215 = scmp.eq.s32.totalorder %s21, 15
    %p216 = por %p214, %p215
    %p217 = scmp.ne.s32.totalorder %s206, %s207
    %p218 = scmp.eq.s32.totalorder %s21, 0
    %p219 = por %p217, %p218
    %p220 = scmp.ne.s32.totalorder %s206, %s207
    %p221 = scmp.eq.s32.totalorder %s22, 15
    %p222 = por %p220, %p221
    %p224 = scmp.ne.s32.totalorder %s207, %s223
    %p225 = scmp.eq.s32.totalorder %s22, 0
    %p226 = por %p224, %p225
    %s227 = ssub.s32 %s23, %s42
    %s228 = ssub.s32 %s25, %s34
    %s229 = sor.u32 %s227, %s228
    %s230 = ssub.s32 %s24, %s38
    %s231 = sor.u32 %s229, %s230
    %p232 = scmp.eq.s32.totalorder %s231, 0
    %s234 = sadd.s32 %s233, 1
    %s235 = scalar_select %p232, %s233, %s234
    %p238 = pneg %p232
    %p239 = scmp.eq.s32.totalorder %s16, 15
    %p240 = por %p238, %p239
    %p241 = scmp.ne.s32.totalorder %s233, %s236
    %p242 = scmp.eq.s32.totalorder %s16, 0
    %p243 = por %p241, %p242
    %p244 = scmp.ne.s32.totalorder %s233, %s236
    %p245 = scmp.eq.s32.totalorder %s21, 15
    %p246 = por %p244, %p245
    %p247 = scmp.ne.s32.totalorder %s236, %s237
    %p248 = scmp.eq.s32.totalorder %s21, 0
    %p249 = por %p247, %p248
    %p250 = scmp.ne.s32.totalorder %s236, %s237
    %p251 = scmp.eq.s32.totalorder %s22, 15
    %p252 = por %p250, %p251
    %p254 = scmp.ne.s32.totalorder %s237, %s253
    %p255 = scmp.eq.s32.totalorder %s22, 0
    %p256 = por %p254, %p255
    %s257 = ssub.s32 %s23, %s42
    %s258 = ssub.s32 %s25, %s34
    %s259 = sor.u32 %s257, %s258
    %s260 = ssub.s32 %s24, %s38
    %s261 = sor.u32 %s259, %s260
    %p262 = scmp.eq.s32.totalorder %s261, 0
    %s264 = sadd.s32 %s263, 1
    %s265 = scalar_select %p262, %s263, %s264
    %p268 = pneg %p262
    %p269 = scmp.eq.s32.totalorder %s16, 15
    %p270 = por %p268, %p269
    %p271 = scmp.ne.s32.totalorder %s263, %s266
    %p272 = scmp.eq.s32.totalorder %s16, 0
    %p273 = por %p271, %p272
    %p274 = scmp.ne.s32.totalorder %s263, %s266
    %p275 = scmp.eq.s32.totalorder %s21, 15
    %p276 = por %p274, %p275
    %p277 = scmp.ne.s32.totalorder %s266, %s267
    %p278 = scmp.eq.s32.totalorder %s21, 0
    %p279 = por %p277, %p278
    %p280 = scmp.ne.s32.totalorder %s266, %s267
    %p281 = scmp.eq.s32.totalorder %s22, 15
    %p282 = por %p280, %p281
    %p284 = scmp.ne.s32.totalorder %s267, %s283
    %p285 = scmp.eq.s32.totalorder %s22, 0
    %p286 = por %p284, %p285
    %s287 = ssub.s32 %s23, %s42
    %s288 = ssub.s32 %s25, %s34
    %s289 = sor.u32 %s287, %s288
    %s290 = ssub.s32 %s24, %s38
    %s291 = sor.u32 %s289, %s290
    %p292 = scmp.eq.s32.totalorder %s291, 0
    %s294 = sadd.s32 %s293, 1
    %s295 = scalar_select %p292, %s293, %s294
    %p298 = pneg %p292
    %p299 = scmp.eq.s32.totalorder %s16, 15
    %p300 = por %p298, %p299
    %p301 = scmp.ne.s32.totalorder %s293, %s296
    %p302 = scmp.eq.s32.totalorder %s16, 0
    %p303 = por %p301, %p302
    %p304 = scmp.ne.s32.totalorder %s293, %s296
    %p305 = scmp.eq.s32.totalorder %s21, 15
    %p306 = por %p304, %p305
    %p307 = scmp.ne.s32.totalorder %s296, %s297
    %p308 = scmp.eq.s32.totalorder %s21, 0
    %p309 = por %p307, %p308
    %p310 = scmp.ne.s32.totalorder %s296, %s297
    %p311 = scmp.eq.s32.totalorder %s22, 15
    %p312 = por %p310, %p311
    %p314 = scmp.ne.s32.totalorder %s297, %s313
    %p315 = scmp.eq.s32.totalorder %s22, 0
    %p316 = por %p314, %p315
    %p317 = scmp.le.s32.totalorder 1, %s16
    %p318 = scmp.lt.s32.totalorder %s16, 17
    %p319 = pnand %p317, %p318
    %p320 = pneg %p319
    // Predicated region
    $region9: #{tpu_custom_call.1} parent=5 // pred_check
      _
    $region10: #{tpu_custom_call.1} parent=5 // pred_check_branch
      %322 = sbr.rel (%p319) target = $region12
    $region11: #{tpu_custom_call.1} parent=5 // pred_region
      %s323 = ssub.s32 %s16, 1
    $region12: #{tpu_custom_call.1} parent=5 // pred_fallthru
      _
    %p324 = scmp.lt.s32.totalorder %s16, 16
    // Predicated region
    $region13: #{tpu_custom_call.1} parent=5 // pred_check
      %p325 = pneg %p324
    $region14: #{tpu_custom_call.1} parent=5 // pred_check_branch
      %327 = sbr.rel (%p325) target = $region16
    $region15: #{tpu_custom_call.1} parent=5 // pred_region
      // Predicated region
      $region17: #{tpu_custom_call.1} parent=15 // pred_check
        %p328 = pneg %p57
      $region18: #{tpu_custom_call.1} parent=15 // pred_check_branch
        %330 = sbr.rel (%p328) target = $region20
      $region19: #{tpu_custom_call.1} parent=15 // pred_region
        %s331 = smul.u32 32, %s24
        %p332 = scmp.lt.s32.totalorder %s23, 1
        %s333 = scalar_select %p332, %s23, 1
        %p334 = scmp.lt.s32.totalorder %s331, 31
        %s335 = scalar_select %p334, %s331, 31
        %s336 = smul.addr %s335, 2
        %s337 = smul.addr %s333, 64
        %s338 = sadd.s32 %s336, %s337
        %s339 = smul.addr %s338, 4
        %s340 = scalar_lea.vmem %s0, %s339
        %s341 = smul.u32 32, %s24
      $region20: #{tpu_custom_call.1} parent=15 // pred_fallthru
        _
      // Predicated region
      $region21: #{tpu_custom_call.1} parent=15 // pred_check
        %p342 = pneg %p83
      $region22: #{tpu_custom_call.1} parent=15 // pred_check_branch
        %344 = sbr.rel (%p342) target = $region24
      $region23: #{tpu_custom_call.1} parent=15 // pred_region
        %p345 = scmp.lt.s32.totalorder %s25, 7
        %s346 = scalar_select %p345, %s25, 7
        %s347 = smul.addr %s346, 32
        %s348 = smul.addr %s347, 4
        %s349 = scalar_lea.vmem %s1, %s348
      $region24: #{tpu_custom_call.1} parent=15 // pred_fallthru
        _
      // Predicated region
      $region25: #{tpu_custom_call.1} parent=15 // pred_check
        %p350 = pneg %p109
      $region26: #{tpu_custom_call.1} parent=15 // pred_check_branch
        %352 = sbr.rel (%p350) target = $region28
      $region27: #{tpu_custom_call.1} parent=15 // pred_region
        %p353 = scmp.lt.s32.totalorder %s25, 7
        %s354 = scalar_select %p353, %s25, 7
        %s355 = smul.addr %s354, 32
        %s356 = smul.addr %s355, 4
        %s357 = scalar_lea.vmem %s2, %s356
      $region28: #{tpu_custom_call.1} parent=15 // pred_fallthru
        _
      // Predicated region
      $region29: #{tpu_custom_call.1} parent=15 // pred_check
        %p358 = pneg %p135
      $region30: #{tpu_custom_call.1} parent=15 // pred_check_branch
        %360 = sbr.rel (%p358) target = $region32
      $region31: #{tpu_custom_call.1} parent=15 // pred_region
        %p361 = scmp.lt.s32.totalorder %s25, 7
        %s362 = scalar_select %p361, %s25, 7
        %s363 = smul.addr %s362, 32
        %s364 = smul.addr %s363, 4
        %s365 = scalar_lea.vmem %s3, %s364
      $region32: #{tpu_custom_call.1} parent=15 // pred_fallthru
        _
      // Predicated region
      $region33: #{tpu_custom_call.1} parent=15 // pred_check
        %p366 = pneg %p161
      $region34: #{tpu_custom_call.1} parent=15 // pred_check_branch
        %368 = sbr.rel (%p366) target = $region36
      $region35: #{tpu_custom_call.1} parent=15 // pred_region
        %p369 = scmp.lt.s32.totalorder %s25, 7
        %s370 = scalar_select %p369, %s25, 7
        %s371 = scalar_lea.vmem %s4, %s370
      $region36: #{tpu_custom_call.1} parent=15 // pred_fallthru
        _
      // Predicated region
      $region37: #{tpu_custom_call.1} parent=15 // pred_check
        %p372 = pneg %p187
      $region38: #{tpu_custom_call.1} parent=15 // pred_check_branch
        %374 = sbr.rel (%p372) target = $region40
      $region39: #{tpu_custom_call.1} parent=15 // pred_region
        %p375 = scmp.lt.s32.totalorder %s25, 7
        %s376 = scalar_select %p375, %s25, 7
        %s377 = scalar_lea.vmem %s5, %s376
      $region40: #{tpu_custom_call.1} parent=15 // pred_fallthru
        _
      // Predicated region
      $region41: #{tpu_custom_call.1} parent=15 // pred_check
        %p378 = pneg %p213
      $region42: #{tpu_custom_call.1} parent=15 // pred_check_branch
        %380 = sbr.rel (%p378) target = $region44
      $region43: #{tpu_custom_call.1} parent=15 // pred_region
        %p381 = scmp.lt.s32.totalorder %s25, 7
        %s382 = scalar_select %p381, %s25, 7
        %s383 = scalar_lea.vmem %s6, %s382
      $region44: #{tpu_custom_call.1} parent=15 // pred_fallthru
        _
    $region16: #{tpu_custom_call.1} parent=5 // pred_fallthru
      _
    %p384 = scmp.le.s32.totalorder 1, %s16
    %p385 = scmp.lt.s32.totalorder %s16, 17
    %p386 = pnand %p384, %p385
    %p387 = pneg %p386
    // Predicated region
    $region45: #{tpu_custom_call.1} parent=5 // pred_check
      _
    $region46: #{tpu_custom_call.1} parent=5 // pred_check_branch
      %389 = sbr.rel (%p386) target = $region48
    $region47: #{tpu_custom_call.1} parent=5 // pred_region
      %s390 = ssub.s32 %s16, 1
      %s391 = smul.u32 32, %s27
      %p392 = scmp.lt.s32.totalorder %s26, 1
      %s393 = scalar_select %p392, %s26, 1
      %p394 = scmp.lt.s32.totalorder %s391, 31
      %s395 = scalar_select %p394, %s391, 31
      %s396 = smul.addr %s395, 2
      %s397 = smul.addr %s393, 64
      %s398 = sadd.s32 %s396, %s397
      %s399 = smul.addr %s398, 4
      %s400 = scalar_lea.vmem %s0, %s399
      %p401 = pneg %p63
      %p402 = pneg %p60
      %p403 = scmp.lt.s32.totalorder %s28, 7
      %s404 = scalar_select %p403, %s28, 7
      %s405 = smul.addr %s404, 32
      %s406 = smul.addr %s405, 4
      %s407 = scalar_lea.vmem %s1, %s406
      %p408 = pneg %p89
      %p409 = pneg %p86
      %p410 = scmp.lt.s32.totalorder %s28, 7
      %s411 = scalar_select %p410, %s28, 7
      %s412 = smul.addr %s411, 32
      %s413 = smul.addr %s412, 4
      %s414 = scalar_lea.vmem %s2, %s413
      %p415 = pneg %p115
      %p416 = pneg %p112
      %p417 = scmp.lt.s32.totalorder %s28, 7
      %s418 = scalar_select %p417, %s28, 7
      %s419 = smul.addr %s418, 32
      %s420 = smul.addr %s419, 4
      %s421 = scalar_lea.vmem %s3, %s420
      %p422 = pneg %p141
      %p423 = pneg %p138
      %p424 = scmp.lt.s32.totalorder %s28, 7
      %s425 = scalar_select %p424, %s28, 7
      %s426 = scalar_lea.vmem %s4, %s425
      %p427 = pneg %p167
      %p428 = pneg %p164
      %p429 = scmp.lt.s32.totalorder %s28, 7
      %s430 = scalar_select %p429, %s28, 7
      %s431 = scalar_lea.vmem %s5, %s430
      %p432 = pneg %p193
      %p433 = pneg %p190
      %p434 = scmp.lt.s32.totalorder %s28, 7
      %s435 = scalar_select %p434, %s28, 7
      %s436 = scalar_lea.vmem %s6, %s435
      %p437 = pneg %p219
      %p438 = pneg %p216
      %p439 = pneg %p249
      %p440 = pneg %p246
      %s441 = smul.u32 32, %s27
      %p442 = scmp.lt.s32.totalorder %s26, 1
      %s443 = scalar_select %p442, %s26, 1
      %p444 = scmp.lt.s32.totalorder %s28, 7
      %s445 = scalar_select %p444, %s28, 7
      %p446 = scmp.lt.s32.totalorder %s441, 31
      %s447 = scalar_select %p446, %s441, 31
      %s448 = smul.addr %s445, 32
      %s449 = sadd.s32 %s447, %s448
      %s450 = smul.addr %s443, 256
      %s451 = sadd.s32 %s449, %s450
      %s452 = smul.addr %s451, 4
      %s453 = scalar_lea.vmem %s7, %s452
      %p454 = pneg %p279
      %p455 = pneg %p276
      %s456 = smul.u32 32, %s27
      %p457 = scmp.lt.s32.totalorder %s26, 1
      %s458 = scalar_select %p457, %s26, 1
      %p459 = scmp.lt.s32.totalorder %s28, 7
      %s460 = scalar_select %p459, %s28, 7
      %p461 = scmp.lt.s32.totalorder %s456, 31
      %s462 = scalar_select %p461, %s456, 31
      %s463 = smul.addr %s460, 32
      %s464 = sadd.s32 %s462, %s463
      %s465 = smul.addr %s458, 256
      %s466 = sadd.s32 %s464, %s465
      %s467 = smul.addr %s466, 4
      %s468 = scalar_lea.vmem %s8, %s467
      %p469 = pneg %p309
      %p470 = pneg %p306
      %s471 = smul.u32 32, %s27
      %p472 = scmp.lt.s32.totalorder %s26, 1
      %s473 = scalar_select %p472, %s26, 1
      %p474 = scmp.lt.s32.totalorder %s28, 7
      %s475 = scalar_select %p474, %s28, 7
      %p476 = scmp.lt.s32.totalorder %s471, 31
      %s477 = scalar_select %p476, %s471, 31
      %s478 = smul.addr %s475, 32
      %s479 = sadd.s32 %s477, %s478
      %s480 = smul.addr %s473, 256
      %s481 = sadd.s32 %s479, %s480
      %s482 = smul.addr %s481, 4
      %s483 = scalar_lea.vmem %s9, %s482
      %s484 = smul.u32 32, %s27
      %p485 = scmp.lt.s32.totalorder %s26, 1
      %s486 = scalar_select %p485, %s26, 1
      %p487 = scmp.lt.s32.totalorder %s484, 31
      %s488 = scalar_select %p487, %s484, 31
      %s489 = smul.addr %s488, 2
      %s490 = smul.addr %s486, 64
      %s491 = sadd.s32 %s489, %s490
      %s492 = smul.addr %s491, 4
      %s493 = scalar_lea.vmem %s0, %s492
      %s494 = smul.u32 32, %s27
      %p495 = scmp.lt.s32.totalorder %s28, 7
      %s496 = scalar_select %p495, %s28, 7
      %s497 = smul.addr %s496, 32
      %s498 = smul.addr %s497, 4
      %s499 = scalar_lea.vmem %s1, %s498
      %p500 = scmp.lt.s32.totalorder %s28, 7
      %s501 = scalar_select %p500, %s28, 7
      %s502 = smul.addr %s501, 32
      %s503 = smul.addr %s502, 4
      %s504 = scalar_lea.vmem %s2, %s503
      %p505 = scmp.lt.s32.totalorder %s28, 7
      %s506 = scalar_select %p505, %s28, 7
      %s507 = smul.addr %s506, 32
      %s508 = smul.addr %s507, 4
      %s509 = scalar_lea.vmem %s3, %s508
      %p510 = scmp.lt.s32.totalorder %s28, 7
      %s511 = scalar_select %p510, %s28, 7
      %s512 = scalar_lea.vmem %s4, %s511
      %p513 = scmp.lt.s32.totalorder %s28, 7
      %s514 = scalar_select %p513, %s28, 7
      %s515 = scalar_lea.vmem %s5, %s514
      %p516 = scmp.lt.s32.totalorder %s28, 7
      %s517 = scalar_select %p516, %s28, 7
      %s518 = scalar_lea.vmem %s6, %s517
      %s519 = smul.u32 32, %s27
      %p520 = scmp.lt.s32.totalorder %s26, 1
      %s521 = scalar_select %p520, %s26, 1
      %p522 = scmp.lt.s32.totalorder %s28, 7
      %s523 = scalar_select %p522, %s28, 7
      %p524 = scmp.lt.s32.totalorder %s519, 31
      %s525 = scalar_select %p524, %s519, 31
      %s526 = smul.addr %s523, 32
      %s527 = sadd.s32 %s525, %s526
      %s528 = smul.addr %s521, 256
      %s529 = sadd.s32 %s527, %s528
      %s530 = smul.addr %s529, 4
      %s531 = scalar_lea.vmem %s7, %s530
      %s532 = smul.u32 32, %s27
      %s533 = smul.u32 32, %s27
      %p534 = scmp.lt.s32.totalorder %s26, 1
      %s535 = scalar_select %p534, %s26, 1
      %p536 = scmp.lt.s32.totalorder %s28, 7
      %s537 = scalar_select %p536, %s28, 7
      %p538 = scmp.lt.s32.totalorder %s533, 31
      %s539 = scalar_select %p538, %s533, 31
      %s540 = smul.addr %s537, 32
      %s541 = sadd.s32 %s539, %s540
      %s542 = smul.addr %s535, 256
      %s543 = sadd.s32 %s541, %s542
      %s544 = smul.addr %s543, 4
      %s545 = scalar_lea.vmem %s8, %s544
      %s546 = smul.u32 32, %s27
      %s547 = smul.u32 32, %s27
      %p548 = scmp.lt.s32.totalorder %s26, 1
      %s549 = scalar_select %p548, %s26, 1
      %p550 = scmp.lt.s32.totalorder %s28, 7
      %s551 = scalar_select %p550, %s28, 7
      %p552 = scmp.lt.s32.totalorder %s547, 31
      %s553 = scalar_select %p552, %s547, 31
      %s554 = smul.addr %s551, 32
      %s555 = sadd.s32 %s553, %s554
      %s556 = smul.addr %s549, 256
      %s557 = sadd.s32 %s555, %s556
      %s558 = smul.addr %s557, 4
      %s559 = scalar_lea.vmem %s9, %s558
      %s560 = smul.u32 32, %s27
      %v562 = vld [vmem:[%s493] sm:$0xff]
      %v563 = vld [vmem:[%s493 + $0x8] sm:$0xff]
      %v564 = vld [vmem:[%s493 + $0x10] sm:$0xff]
      %v565 = vld [vmem:[%s493 + $0x18] sm:$0xff]
      %v566 = vld [vmem:[%s493 + $0x20] sm:$0xff]
      %v567 = vld [vmem:[%s493 + $0x28] sm:$0xff]
      %v568 = vld [vmem:[%s493 + $0x30] sm:$0xff]
      %v569 = vld [vmem:[%s493 + $0x38] sm:$0xff]
      %v570 = vld [vmem:[%s493 + $0x40] sm:$0xff]
      %v571 = vld [vmem:[%s493 + $0x48] sm:$0xff]
      %v572 = vld [vmem:[%s493 + $0x50] sm:$0xff]
      %v573 = vld [vmem:[%s493 + $0x58] sm:$0xff]
      %v574 = vld [vmem:[%s493 + $0x60] sm:$0xff]
      %v575 = vld [vmem:[%s493 + $0x68] sm:$0xff]
      %v576 = vld [vmem:[%s493 + $0x70] sm:$0xff]
      %v577 = vld [vmem:[%s493 + $0x78] sm:$0xff]
      %v578 = vld [vmem:[%s493 + $0x80] sm:$0xff]
      %v579 = vld [vmem:[%s493 + $0x88] sm:$0xff]
      %v580 = vld [vmem:[%s493 + $0x90] sm:$0xff]
      %v581 = vld [vmem:[%s493 + $0x98] sm:$0xff]
      %v582 = vld [vmem:[%s493 + $0xa0] sm:$0xff]
      %v583 = vld [vmem:[%s493 + $0xa8] sm:$0xff]
      %v584 = vld [vmem:[%s493 + $0xb0] sm:$0xff]
      %v585 = vld [vmem:[%s493 + $0xb8] sm:$0xff]
      %v586 = vld [vmem:[%s493 + $0xc0] sm:$0xff]
      %v587 = vld [vmem:[%s493 + $0xc8] sm:$0xff]
      %v588 = vld [vmem:[%s493 + $0xd0] sm:$0xff]
      %v589 = vld [vmem:[%s493 + $0xd8] sm:$0xff]
      %v590 = vld [vmem:[%s493 + $0xe0] sm:$0xff]
      %v591 = vld [vmem:[%s493 + $0xe8] sm:$0xff]
      %v592 = vld [vmem:[%s493 + $0xf0] sm:$0xff]
      %v593 = vld [vmem:[%s493 + $0xf8] sm:$0xff]
      %v594 = vld [vmem:[%s499] sm:$0xf]
      %v595 = vld [vmem:[%s499 + $0x4] sm:$0xf]
      %v596 = vld [vmem:[%s499 + $0x8] sm:$0xf]
      %v597 = vld [vmem:[%s499 + $0xc] sm:$0xf]
      %v598 = vld [vmem:[%s499 + $0x10] sm:$0xf]
      %v599 = vld [vmem:[%s499 + $0x14] sm:$0xf]
      %v600 = vld [vmem:[%s499 + $0x18] sm:$0xf]
      %v601 = vld [vmem:[%s499 + $0x1c] sm:$0xf]
      %v602 = vld [vmem:[%s499 + $0x20] sm:$0xf]
      %v603 = vld [vmem:[%s499 + $0x24] sm:$0xf]
      %v604 = vld [vmem:[%s499 + $0x28] sm:$0xf]
      %v605 = vld [vmem:[%s499 + $0x2c] sm:$0xf]
      %v606 = vld [vmem:[%s499 + $0x30] sm:$0xf]
      %v607 = vld [vmem:[%s499 + $0x34] sm:$0xf]
      %v608 = vld [vmem:[%s499 + $0x38] sm:$0xf]
      %v609 = vld [vmem:[%s499 + $0x3c] sm:$0xf]
      %v610 = vld [vmem:[%s499 + $0x40] sm:$0xf]
      %v611 = vld [vmem:[%s499 + $0x44] sm:$0xf]
      %v612 = vld [vmem:[%s499 + $0x48] sm:$0xf]
      %v613 = vld [vmem:[%s499 + $0x4c] sm:$0xf]
      %v614 = vld [vmem:[%s499 + $0x50] sm:$0xf]
      %v615 = vld [vmem:[%s499 + $0x54] sm:$0xf]
      %v616 = vld [vmem:[%s499 + $0x58] sm:$0xf]
      %v617 = vld [vmem:[%s499 + $0x5c] sm:$0xf]
      %v618 = vld [vmem:[%s499 + $0x60] sm:$0xf]
      %v619 = vld [vmem:[%s499 + $0x64] sm:$0xf]
      %v620 = vld [vmem:[%s499 + $0x68] sm:$0xf]
      %v621 = vld [vmem:[%s499 + $0x6c] sm:$0xf]
      %v622 = vld [vmem:[%s499 + $0x70] sm:$0xf]
      %v623 = vld [vmem:[%s499 + $0x74] sm:$0xf]
      %v624 = vld [vmem:[%s499 + $0x78] sm:$0xf]
      %v625 = vld [vmem:[%s499 + $0x7c] sm:$0xf]
      %v626 = vld [vmem:[%s512] sm:$0x1]
      %v628 = vlaneseq
      %v629 = vshrl.u32 %v628, 7
      %v630 = vsub.s32 0, %v629
      %v631 = vrot.slane %v626, %v630
      %v665 = vunpack.c.l.b16 %v562
      %v666 = vunpack.c.h.b16 %v562
      %v667 = vunpack.c.l.b16 %v563
      %v668 = vunpack.c.h.b16 %v563
      %v669 = vunpack.c.l.b16 %v564
      %v670 = vunpack.c.h.b16 %v564
      %v671 = vunpack.c.l.b16 %v565
      %v672 = vunpack.c.h.b16 %v565
      %v673 = vunpack.c.l.b16 %v566
      %v674 = vunpack.c.h.b16 %v566
      %v675 = vunpack.c.l.b16 %v567
      %v676 = vunpack.c.h.b16 %v567
      %v677 = vunpack.c.l.b16 %v568
      %v678 = vunpack.c.h.b16 %v568
      %v679 = vunpack.c.l.b16 %v569
      %v680 = vunpack.c.h.b16 %v569
      %v681 = vunpack.c.l.b16 %v570
      %v682 = vunpack.c.h.b16 %v570
      %v683 = vunpack.c.l.b16 %v571
      %v684 = vunpack.c.h.b16 %v571
      %v685 = vunpack.c.l.b16 %v572
      %v686 = vunpack.c.h.b16 %v572
      %v687 = vunpack.c.l.b16 %v573
      %v688 = vunpack.c.h.b16 %v573
      %v689 = vunpack.c.l.b16 %v574
      %v690 = vunpack.c.h.b16 %v574
      %v691 = vunpack.c.l.b16 %v575
      %v692 = vunpack.c.h.b16 %v575
      %v693 = vunpack.c.l.b16 %v576
      %v694 = vunpack.c.h.b16 %v576
      %v695 = vunpack.c.l.b16 %v577
      %v696 = vunpack.c.h.b16 %v577
      %v697 = vunpack.c.l.b16 %v578
      %v698 = vunpack.c.h.b16 %v578
      %v699 = vunpack.c.l.b16 %v579
      %v700 = vunpack.c.h.b16 %v579
      %v701 = vunpack.c.l.b16 %v580
      %v702 = vunpack.c.h.b16 %v580
      %v703 = vunpack.c.l.b16 %v581
      %v704 = vunpack.c.h.b16 %v581
      %v705 = vunpack.c.l.b16 %v582
      %v706 = vunpack.c.h.b16 %v582
      %v707 = vunpack.c.l.b16 %v583
      %v708 = vunpack.c.h.b16 %v583
      %v709 = vunpack.c.l.b16 %v584
      %v710 = vunpack.c.h.b16 %v584
      %v711 = vunpack.c.l.b16 %v585
      %v712 = vunpack.c.h.b16 %v585
      %v713 = vunpack.c.l.b16 %v586
      %v714 = vunpack.c.h.b16 %v586
      %v715 = vunpack.c.l.b16 %v587
      %v716 = vunpack.c.h.b16 %v587
      %v717 = vunpack.c.l.b16 %v588
      %v718 = vunpack.c.h.b16 %v588
      %v719 = vunpack.c.l.b16 %v589
      %v720 = vunpack.c.h.b16 %v589
      %v721 = vunpack.c.l.b16 %v590
      %v722 = vunpack.c.h.b16 %v590
      %v723 = vunpack.c.l.b16 %v591
      %v724 = vunpack.c.h.b16 %v591
      %v725 = vunpack.c.l.b16 %v592
      %v726 = vunpack.c.h.b16 %v592
      %v727 = vunpack.c.l.b16 %v593
      %v728 = vunpack.c.h.b16 %v593
      %v729 = vpack.c.b16 %v667, %v665
      %v730 = vpack.c.b16 %v668, %v666
      %v731 = vpack.c.b16 %v671, %v669
      %v732 = vpack.c.b16 %v672, %v670
      %v733 = vpack.c.b16 %v675, %v673
      %v734 = vpack.c.b16 %v676, %v674
      %v735 = vpack.c.b16 %v679, %v677
      %v736 = vpack.c.b16 %v680, %v678
      %v737 = vpack.c.b16 %v683, %v681
      %v738 = vpack.c.b16 %v684, %v682
      %v739 = vpack.c.b16 %v687, %v685
      %v740 = vpack.c.b16 %v688, %v686
      %v741 = vpack.c.b16 %v691, %v689
      %v742 = vpack.c.b16 %v692, %v690
      %v743 = vpack.c.b16 %v695, %v693
      %v744 = vpack.c.b16 %v696, %v694
      %v745 = vpack.c.b16 %v699, %v697
      %v746 = vpack.c.b16 %v700, %v698
      %v747 = vpack.c.b16 %v703, %v701
      %v748 = vpack.c.b16 %v704, %v702
      %v749 = vpack.c.b16 %v707, %v705
      %v750 = vpack.c.b16 %v708, %v706
      %v751 = vpack.c.b16 %v711, %v709
      %v752 = vpack.c.b16 %v712, %v710
      %v753 = vpack.c.b16 %v715, %v713
      %v754 = vpack.c.b16 %v716, %v714
      %v755 = vpack.c.b16 %v719, %v717
      %v756 = vpack.c.b16 %v720, %v718
      %v757 = vpack.c.b16 %v723, %v721
      %v758 = vpack.c.b16 %v724, %v722
      %v759 = vpack.c.b16 %v727, %v725
      %v760 = vpack.c.b16 %v728, %v726
      %v825 = vunpack.c.l.b16 %v594
      %v826 = vunpack.c.l.b16 %v595
      %v827 = vunpack.c.l.b16 %v596
      %v828 = vunpack.c.l.b16 %v597
      %v829 = vunpack.c.l.b16 %v598
      %v830 = vunpack.c.l.b16 %v599
      %v831 = vunpack.c.l.b16 %v600
      %v832 = vunpack.c.l.b16 %v601
      %v833 = vunpack.c.l.b16 %v602
      %v834 = vunpack.c.l.b16 %v603
      %v835 = vunpack.c.l.b16 %v604
      %v836 = vunpack.c.l.b16 %v605
      %v837 = vunpack.c.l.b16 %v606
      %v838 = vunpack.c.l.b16 %v607
      %v839 = vunpack.c.l.b16 %v608
      %v840 = vunpack.c.l.b16 %v609
      %v841 = vunpack.c.l.b16 %v610
      %v842 = vunpack.c.l.b16 %v611
      %v843 = vunpack.c.l.b16 %v612
      %v844 = vunpack.c.l.b16 %v613
      %v845 = vunpack.c.l.b16 %v614
      %v846 = vunpack.c.l.b16 %v615
      %v847 = vunpack.c.l.b16 %v616
      %v848 = vunpack.c.l.b16 %v617
      %v849 = vunpack.c.l.b16 %v618
      %v850 = vunpack.c.l.b16 %v619
      %v851 = vunpack.c.l.b16 %v620
      %v852 = vunpack.c.l.b16 %v621
      %v853 = vunpack.c.l.b16 %v622
      %v854 = vunpack.c.l.b16 %v623
      %v855 = vunpack.c.l.b16 %v624
      %v856 = vunpack.c.l.b16 %v625
      %v857 = vpack.c.b16 %v826, %v825
      %v858 = vpack.c.b16 %v828, %v827
      %v859 = vpack.c.b16 %v830, %v829
      %v860 = vpack.c.b16 %v832, %v831
      %v861 = vpack.c.b16 %v834, %v833
      %v862 = vpack.c.b16 %v836, %v835
      %v863 = vpack.c.b16 %v838, %v837
      %v864 = vpack.c.b16 %v840, %v839
      %v865 = vpack.c.b16 %v842, %v841
      %v866 = vpack.c.b16 %v844, %v843
      %v867 = vpack.c.b16 %v846, %v845
      %v868 = vpack.c.b16 %v848, %v847
      %v869 = vpack.c.b16 %v850, %v849
      %v870 = vpack.c.b16 %v852, %v851
      %v871 = vpack.c.b16 %v854, %v853
      %v872 = vpack.c.b16 %v856, %v855
      %889 = vmatprep.subr.bf16.mxu0 0
      %890 = vmatpush1.bf16.msra.mxu0 %v857
      %891 = vmatprep.subr.bf16.mxu0 0
      %892 = vmatpush1.bf16.msra.mxu0 %v858
      %893 = vmatprep.subr.bf16.mxu0 0
      %894 = vmatpush1.bf16.msra.mxu0 %v859
      %895 = vmatprep.subr.bf16.mxu0 0
      %896 = vmatpush1.bf16.msra.mxu0 %v860
      %897 = vmatprep.subr.bf16.mxu0 0
      %898 = vmatpush1.bf16.msra.mxu0 %v861
      %899 = vmatprep.subr.bf16.mxu0 0
      %900 = vmatpush1.bf16.msra.mxu0 %v862
      %901 = vmatprep.subr.bf16.mxu0 0
      %902 = vmatpush1.bf16.msra.mxu0 %v863
      %903 = vmatprep.subr.bf16.mxu0 0
      %904 = vmatpush1.bf16.msra.mxu0 %v864
      %905 = vmatprep.subr.bf16.mxu0 0
      %906 = vmatpush1.bf16.msra.mxu0 %v865
      %907 = vmatprep.subr.bf16.mxu0 0
      %908 = vmatpush1.bf16.msra.mxu0 %v866
      %909 = vmatprep.subr.bf16.mxu0 0
      %910 = vmatpush1.bf16.msra.mxu0 %v867
      %911 = vmatprep.subr.bf16.mxu0 0
      %912 = vmatpush1.bf16.msra.mxu0 %v868
      %913 = vmatprep.subr.bf16.mxu0 0
      %914 = vmatpush1.bf16.msra.mxu0 %v869
      %915 = vmatprep.subr.bf16.mxu0 0
      %916 = vmatpush1.bf16.msra.mxu0 %v870
      %917 = vmatprep.subr.bf16.mxu0 0
      %918 = vmatpush1.bf16.msra.mxu0 %v871
      %919 = vmatprep.subr.bf16.mxu0 0
      %920 = vmatpush1.bf16.msra.mxu0 %v872
      %921 = vmatprep.mubr.bf16.mxu0 %v730
      %922 = vmatmul.mubr.bf16.gmra.mrb[0].mxu0 %v729
      %v923 = vpop.f32.mrb[0].mxu0
      %v924 = vadd.f32 %v631, %v923
      %v925 = vpop.f32.mrb[0].mxu0
      %v926 = vpop.f32.mrb[0].mxu0
      %v927 = vadd.f32 %v631, %v926
      %v928 = vpop.f32.mrb[0].mxu0
      %929 = vmatprep.mubr.bf16.mxu0 %v732
      %930 = vmatmul.mubr.bf16.gmra.mrb[0].mxu0 %v731
      %v931 = vpop.f32.mrb[0].mxu0
      %v932 = vadd.f32 %v631, %v931
      %v933 = vpop.f32.mrb[0].mxu0
      %v934 = vpop.f32.mrb[0].mxu0
      %v935 = vadd.f32 %v631, %v934
      %v936 = vpop.f32.mrb[0].mxu0
      %937 = vmatprep.mubr.bf16.mxu0 %v734
      %938 = vmatmul.mubr.bf16.gmra.mrb[0].mxu0 %v733
      %v939 = vpop.f32.mrb[0].mxu0
      %v940 = vadd.f32 %v631, %v939
      %v941 = vpop.f32.mrb[0].mxu0
      %v942 = vpop.f32.mrb[0].mxu0
      %v943 = vadd.f32 %v631, %v942
      %v944 = vpop.f32.mrb[0].mxu0
      %945 = vmatprep.mubr.bf16.mxu0 %v736
      %946 = vmatmul.mubr.bf16.gmra.mrb[0].mxu0 %v735
      %v947 = vpop.f32.mrb[0].mxu0
      %v948 = vadd.f32 %v631, %v947
      %v949 = vpop.f32.mrb[0].mxu0
      %v950 = vpop.f32.mrb[0].mxu0
      %v951 = vadd.f32 %v631, %v950
      %v952 = vpop.f32.mrb[0].mxu0
      %953 = vmatprep.mubr.bf16.mxu0 %v738
      %954 = vmatmul.mubr.bf16.gmra.mrb[0].mxu0 %v737
      %v955 = vpop.f32.mrb[0].mxu0
      %v956 = vadd.f32 %v631, %v955
      %v957 = vpop.f32.mrb[0].mxu0
      %v958 = vpop.f32.mrb[0].mxu0
      %v959 = vadd.f32 %v631, %v958
      %v960 = vpop.f32.mrb[0].mxu0
      %961 = vmatprep.mubr.bf16.mxu0 %v740
      %962 = vmatmul.mubr.bf16.gmra.mrb[0].mxu0 %v739
      %v963 = vpop.f32.mrb[0].mxu0
      %v964 = vadd.f32 %v631, %v963
      %v965 = vpop.f32.mrb[0].mxu0
      %v966 = vpop.f32.mrb[0].mxu0
      %v967 = vadd.f32 %v631, %v966
      %v968 = vpop.f32.mrb[0].mxu0
      %969 = vmatprep.mubr.bf16.mxu0 %v742
      %970 = vmatmul.mubr.bf16.gmra.mrb[0].mxu0 %v741
      %v971 = vpop.f32.mrb[0].mxu0
      %v972 = vadd.f32 %v631, %v971
      %v973 = vpop.f32.mrb[0].mxu0
      %v974 = vpop.f32.mrb[0].mxu0
      %v975 = vadd.f32 %v631, %v974
      %v976 = vpop.f32.mrb[0].mxu0
      %977 = vmatprep.mubr.bf16.mxu0 %v744
      %978 = vmatmul.mubr.bf16.gmra.mrb[0].mxu0 %v743
      %v979 = vpop.f32.mrb[0].mxu0
      %v980 = vadd.f32 %v631, %v979
      %v981 = vpop.f32.mrb[0].mxu0
      %v982 = vpop.f32.mrb[0].mxu0
      %v983 = vadd.f32 %v631, %v982
      %v984 = vpop.f32.mrb[0].mxu0
      %985 = vmatprep.mubr.bf16.mxu0 %v746
      %986 = vmatmul.mubr.bf16.gmra.mrb[0].mxu0 %v745
      %v987 = vpop.f32.mrb[0].mxu0
      %v988 = vadd.f32 %v631, %v987
      %v989 = vpop.f32.mrb[0].mxu0
      %v990 = vpop.f32.mrb[0].mxu0
      %v991 = vadd.f32 %v631, %v990
      %v992 = vpop.f32.mrb[0].mxu0
      %993 = vmatprep.mubr.bf16.mxu0 %v748
      %994 = vmatmul.mubr.bf16.gmra.mrb[0].mxu0 %v747
      %v995 = vpop.f32.mrb[0].mxu0
      %v996 = vadd.f32 %v631, %v995
      %v997 = vpop.f32.mrb[0].mxu0
      %v998 = vpop.f32.mrb[0].mxu0
      %v999 = vadd.f32 %v631, %v998
      %v1000 = vpop.f32.mrb[0].mxu0
      %1001 = vmatprep.mubr.bf16.mxu0 %v750
      %1002 = vmatmul.mubr.bf16.gmra.mrb[0].mxu0 %v749
      %v1003 = vpop.f32.mrb[0].mxu0
      %v1004 = vadd.f32 %v631, %v1003
      %v1005 = vpop.f32.mrb[0].mxu0
      %v1006 = vpop.f32.mrb[0].mxu0
      %v1007 = vadd.f32 %v631, %v1006
      %v1008 = vpop.f32.mrb[0].mxu0
      %1009 = vmatprep.mubr.bf16.mxu0 %v752
      %1010 = vmatmul.mubr.bf16.gmra.mrb[0].mxu0 %v751
      %v1011 = vpop.f32.mrb[0].mxu0
      %v1012 = vadd.f32 %v631, %v1011
      %v1013 = vpop.f32.mrb[0].mxu0
      %v1014 = vpop.f32.mrb[0].mxu0
      %v1015 = vadd.f32 %v631, %v1014
      %v1016 = vpop.f32.mrb[0].mxu0
      %1017 = vmatprep.mubr.bf16.mxu0 %v754
      %1018 = vmatmul.mubr.bf16.gmra.mrb[0].mxu0 %v753
      %v1019 = vpop.f32.mrb[0].mxu0
      %v1020 = vadd.f32 %v631, %v1019
      %v1021 = vpop.f32.mrb[0].mxu0
      %v1022 = vpop.f32.mrb[0].mxu0
      %v1023 = vadd.f32 %v631, %v1022
      %v1024 = vpop.f32.mrb[0].mxu0
      %1025 = vmatprep.mubr.bf16.mxu0 %v756
      %1026 = vmatmul.mubr.bf16.gmra.mrb[0].mxu0 %v755
      %v1027 = vpop.f32.mrb[0].mxu0
      %v1028 = vadd.f32 %v631, %v1027
      %v1029 = vpop.f32.mrb[0].mxu0
      %v1030 = vpop.f32.mrb[0].mxu0
      %v1031 = vadd.f32 %v631, %v1030
      %v1032 = vpop.f32.mrb[0].mxu0
      %1033 = vmatprep.mubr.bf16.mxu0 %v758
      %1034 = vmatmul.mubr.bf16.gmra.mrb[0].mxu0 %v757
      %v1035 = vpop.f32.mrb[0].mxu0
      %v1036 = vadd.f32 %v631, %v1035
      %v1037 = vpop.f32.mrb[0].mxu0
      %v1038 = vpop.f32.mrb[0].mxu0
      %v1039 = vadd.f32 %v631, %v1038
      %v1040 = vpop.f32.mrb[0].mxu0
      %1041 = vmatprep.mubr.bf16.mxu0 %v760
      %1042 = vmatmul.mubr.bf16.gmra.mrb[0].mxu0 %v759
      %v1043 = vpop.f32.mrb[0].mxu0
      %v1044 = vadd.f32 %v631, %v1043
      %v1045 = vpop.f32.mrb[0].mxu0
      %v1046 = vpop.f32.mrb[0].mxu0
      %v1047 = vadd.f32 %v631, %v1046
      %v1048 = vpop.f32.mrb[0].mxu0
      %1049 = vdwg.mxu0
      %v1050 = vmul.f32 %v924, 0.17677669
      %v1051 = vmul.f32 %v927, 0.17677669
      %v1052 = vmul.f32 %v932, 0.17677669
      %v1053 = vmul.f32 %v935, 0.17677669
      %v1054 = vmul.f32 %v940, 0.17677669
      %v1055 = vmul.f32 %v943, 0.17677669
      %v1056 = vmul.f32 %v948, 0.17677669
      %v1057 = vmul.f32 %v951, 0.17677669
      %v1058 = vmul.f32 %v956, 0.17677669
      %v1059 = vmul.f32 %v959, 0.17677669
      %v1060 = vmul.f32 %v964, 0.17677669
      %v1061 = vmul.f32 %v967, 0.17677669
      %v1062 = vmul.f32 %v972, 0.17677669
      %v1063 = vmul.f32 %v975, 0.17677669
      %v1064 = vmul.f32 %v980, 0.17677669
      %v1065 = vmul.f32 %v983, 0.17677669
      %v1066 = vmul.f32 %v988, 0.17677669
      %v1067 = vmul.f32 %v991, 0.17677669
      %v1068 = vmul.f32 %v996, 0.17677669
      %v1069 = vmul.f32 %v999, 0.17677669
      %v1070 = vmul.f32 %v1004, 0.17677669
      %v1071 = vmul.f32 %v1007, 0.17677669
      %v1072 = vmul.f32 %v1012, 0.17677669
      %v1073 = vmul.f32 %v1015, 0.17677669
      %v1074 = vmul.f32 %v1020, 0.17677669
      %v1075 = vmul.f32 %v1023, 0.17677669
      %v1076 = vmul.f32 %v1028, 0.17677669
      %v1077 = vmul.f32 %v1031, 0.17677669
      %v1078 = vmul.f32 %v1036, 0.17677669
      %v1079 = vmul.f32 %v1039, 0.17677669
      %v1080 = vmul.f32 %v1044, 0.17677669
      %v1081 = vmul.f32 %v1047, 0.17677669
      %v1082 = vpack.c.bf16 %v1051, %v1050
      %v1083 = vpack.c.bf16 %v1053, %v1052
      %v1084 = vpack.c.bf16 %v1055, %v1054
      %v1085 = vpack.c.bf16 %v1057, %v1056
      %v1086 = vpack.c.bf16 %v1059, %v1058
      %v1087 = vpack.c.bf16 %v1061, %v1060
      %v1088 = vpack.c.bf16 %v1063, %v1062
      %v1089 = vpack.c.bf16 %v1065, %v1064
      %v1090 = vpack.c.bf16 %v1067, %v1066
      %v1091 = vpack.c.bf16 %v1069, %v1068
      %v1092 = vpack.c.bf16 %v1071, %v1070
      %v1093 = vpack.c.bf16 %v1073, %v1072
      %v1094 = vpack.c.bf16 %v1075, %v1074
      %v1095 = vpack.c.bf16 %v1077, %v1076
      %v1096 = vpack.c.bf16 %v1079, %v1078
      %v1097 = vpack.c.bf16 %v1081, %v1080
      %v1114 = vunpack.c.l.b16 %v1082
      %v1115 = vunpack.c.h.b16 %v1082
      %v1116 = vunpack.c.l.b16 %v1083
      %v1117 = vunpack.c.h.b16 %v1083
      %v1118 = vunpack.c.l.b16 %v1084
      %v1119 = vunpack.c.h.b16 %v1084
      %v1120 = vunpack.c.l.b16 %v1085
      %v1121 = vunpack.c.h.b16 %v1085
      %v1122 = vunpack.c.l.b16 %v1086
      %v1123 = vunpack.c.h.b16 %v1086
      %v1124 = vunpack.c.l.b16 %v1087
      %v1125 = vunpack.c.h.b16 %v1087
      %v1126 = vunpack.c.l.b16 %v1088
      %v1127 = vunpack.c.h.b16 %v1088
      %v1128 = vunpack.c.l.b16 %v1089
      %v1129 = vunpack.c.h.b16 %v1089
      %v1130 = vunpack.c.l.b16 %v1090
      %v1131 = vunpack.c.h.b16 %v1090
      %v1132 = vunpack.c.l.b16 %v1091
      %v1133 = vunpack.c.h.b16 %v1091
      %v1134 = vunpack.c.l.b16 %v1092
      %v1135 = vunpack.c.h.b16 %v1092
      %v1136 = vunpack.c.l.b16 %v1093
      %v1137 = vunpack.c.h.b16 %v1093
      %v1138 = vunpack.c.l.b16 %v1094
      %v1139 = vunpack.c.h.b16 %v1094
      %v1140 = vunpack.c.l.b16 %v1095
      %v1141 = vunpack.c.h.b16 %v1095
      %v1142 = vunpack.c.l.b16 %v1096
      %v1143 = vunpack.c.h.b16 %v1096
      %v1144 = vunpack.c.l.b16 %v1097
      %v1145 = vunpack.c.h.b16 %v1097
      %v1146 = vpack.c.b16 %v1114, %v1114
      %v1147 = vpack.c.b16 %v1115, %v1115
      %v1148 = vpack.c.b16 %v1116, %v1116
      %v1149 = vpack.c.b16 %v1117, %v1117
      %v1150 = vpack.c.b16 %v1118, %v1118
      %v1151 = vpack.c.b16 %v1119, %v1119
      %v1152 = vpack.c.b16 %v1120, %v1120
      %v1153 = vpack.c.b16 %v1121, %v1121
      %v1154 = vpack.c.b16 %v1122, %v1122
      %v1155 = vpack.c.b16 %v1123, %v1123
      %v1156 = vpack.c.b16 %v1124, %v1124
      %v1157 = vpack.c.b16 %v1125, %v1125
      %v1158 = vpack.c.b16 %v1126, %v1126
      %v1159 = vpack.c.b16 %v1127, %v1127
      %v1160 = vpack.c.b16 %v1128, %v1128
      %v1161 = vpack.c.b16 %v1129, %v1129
      %v1162 = vpack.c.b16 %v1130, %v1130
      %v1163 = vpack.c.b16 %v1131, %v1131
      %v1164 = vpack.c.b16 %v1132, %v1132
      %v1165 = vpack.c.b16 %v1133, %v1133
      %v1166 = vpack.c.b16 %v1134, %v1134
      %v1167 = vpack.c.b16 %v1135, %v1135
      %v1168 = vpack.c.b16 %v1136, %v1136
      %v1169 = vpack.c.b16 %v1137, %v1137
      %v1170 = vpack.c.b16 %v1138, %v1138
      %v1171 = vpack.c.b16 %v1139, %v1139
      %v1172 = vpack.c.b16 %v1140, %v1140
      %v1173 = vpack.c.b16 %v1141, %v1141
      %v1174 = vpack.c.b16 %v1142, %v1142
      %v1175 = vpack.c.b16 %v1143, %v1143
      %v1176 = vpack.c.b16 %v1144, %v1144
      %v1177 = vpack.c.b16 %v1145, %v1145
      %vm1210 = vcmask 257024
      %1211 = vst.msk [vmem:[%s531] sm:$0xf] %vm1210, %v1146
      %1212 = vst.msk [vmem:[%s531 + $0x4] sm:$0xf] %vm1210, %v1147
      %1213 = vst.msk [vmem:[%s531 + $0x8] sm:$0xf] %vm1210, %v1148
      %1214 = vst.msk [vmem:[%s531 + $0xc] sm:$0xf] %vm1210, %v1149
      %1215 = vst.msk [vmem:[%s531 + $0x10] sm:$0xf] %vm1210, %v1150
      %1216 = vst.msk [vmem:[%s531 + $0x14] sm:$0xf] %vm1210, %v1151
      %1217 = vst.msk [vmem:[%s531 + $0x18] sm:$0xf] %vm1210, %v1152
      %1218 = vst.msk [vmem:[%s531 + $0x1c] sm:$0xf] %vm1210, %v1153
      %1219 = vst.msk [vmem:[%s531 + $0x20] sm:$0xf] %vm1210, %v1154
      %1220 = vst.msk [vmem:[%s531 + $0x24] sm:$0xf] %vm1210, %v1155
      %1221 = vst.msk [vmem:[%s531 + $0x28] sm:$0xf] %vm1210, %v1156
      %1222 = vst.msk [vmem:[%s531 + $0x2c] sm:$0xf] %vm1210, %v1157
      %1223 = vst.msk [vmem:[%s531 + $0x30] sm:$0xf] %vm1210, %v1158
      %1224 = vst.msk [vmem:[%s531 + $0x34] sm:$0xf] %vm1210, %v1159
      %1225 = vst.msk [vmem:[%s531 + $0x38] sm:$0xf] %vm1210, %v1160
      %1226 = vst.msk [vmem:[%s531 + $0x3c] sm:$0xf] %vm1210, %v1161
      %1227 = vst.msk [vmem:[%s531 + $0x40] sm:$0xf] %vm1210, %v1162
      %1228 = vst.msk [vmem:[%s531 + $0x44] sm:$0xf] %vm1210, %v1163
      %1229 = vst.msk [vmem:[%s531 + $0x48] sm:$0xf] %vm1210, %v1164
      %1230 = vst.msk [vmem:[%s531 + $0x4c] sm:$0xf] %vm1210, %v1165
      %1231 = vst.msk [vmem:[%s531 + $0x50] sm:$0xf] %vm1210, %v1166
      %1232 = vst.msk [vmem:[%s531 + $0x54] sm:$0xf] %vm1210, %v1167
      %1233 = vst.msk [vmem:[%s531 + $0x58] sm:$0xf] %vm1210, %v1168
      %1234 = vst.msk [vmem:[%s531 + $0x5c] sm:$0xf] %vm1210, %v1169
      %1235 = vst.msk [vmem:[%s531 + $0x60] sm:$0xf] %vm1210, %v1170
      %1236 = vst.msk [vmem:[%s531 + $0x64] sm:$0xf] %vm1210, %v1171
      %1237 = vst.msk [vmem:[%s531 + $0x68] sm:$0xf] %vm1210, %v1172
      %1238 = vst.msk [vmem:[%s531 + $0x6c] sm:$0xf] %vm1210, %v1173
      %1239 = vst.msk [vmem:[%s531 + $0x70] sm:$0xf] %vm1210, %v1174
      %1240 = vst.msk [vmem:[%s531 + $0x74] sm:$0xf] %vm1210, %v1175
      %1241 = vst.msk [vmem:[%s531 + $0x78] sm:$0xf] %vm1210, %v1176
      %1242 = vst.msk [vmem:[%s531 + $0x7c] sm:$0xf] %vm1210, %v1177
      %v1243 = vld [vmem:[%s504] sm:$0xf]
      %v1244 = vld [vmem:[%s504 + $0x4] sm:$0xf]
      %v1245 = vld [vmem:[%s504 + $0x8] sm:$0xf]
      %v1246 = vld [vmem:[%s504 + $0xc] sm:$0xf]
      %v1247 = vld [vmem:[%s504 + $0x10] sm:$0xf]
      %v1248 = vld [vmem:[%s504 + $0x14] sm:$0xf]
      %v1249 = vld [vmem:[%s504 + $0x18] sm:$0xf]
      %v1250 = vld [vmem:[%s504 + $0x1c] sm:$0xf]
      %v1251 = vld [vmem:[%s504 + $0x20] sm:$0xf]
      %v1252 = vld [vmem:[%s504 + $0x24] sm:$0xf]
      %v1253 = vld [vmem:[%s504 + $0x28] sm:$0xf]
      %v1254 = vld [vmem:[%s504 + $0x2c] sm:$0xf]
      %v1255 = vld [vmem:[%s504 + $0x30] sm:$0xf]
      %v1256 = vld [vmem:[%s504 + $0x34] sm:$0xf]
      %v1257 = vld [vmem:[%s504 + $0x38] sm:$0xf]
      %v1258 = vld [vmem:[%s504 + $0x3c] sm:$0xf]
      %v1259 = vld [vmem:[%s504 + $0x40] sm:$0xf]
      %v1260 = vld [vmem:[%s504 + $0x44] sm:$0xf]
      %v1261 = vld [vmem:[%s504 + $0x48] sm:$0xf]
      %v1262 = vld [vmem:[%s504 + $0x4c] sm:$0xf]
      %v1263 = vld [vmem:[%s504 + $0x50] sm:$0xf]
      %v1264 = vld [vmem:[%s504 + $0x54] sm:$0xf]
      %v1265 = vld [vmem:[%s504 + $0x58] sm:$0xf]
      %v1266 = vld [vmem:[%s504 + $0x5c] sm:$0xf]
      %v1267 = vld [vmem:[%s504 + $0x60] sm:$0xf]
      %v1268 = vld [vmem:[%s504 + $0x64] sm:$0xf]
      %v1269 = vld [vmem:[%s504 + $0x68] sm:$0xf]
      %v1270 = vld [vmem:[%s504 + $0x6c] sm:$0xf]
      %v1271 = vld [vmem:[%s504 + $0x70] sm:$0xf]
      %v1272 = vld [vmem:[%s504 + $0x74] sm:$0xf]
      %v1273 = vld [vmem:[%s504 + $0x78] sm:$0xf]
      %v1274 = vld [vmem:[%s504 + $0x7c] sm:$0xf]
      %v1275 = vld [vmem:[%s515] sm:$0x1]
      %v1277 = vlaneseq
      %v1278 = vshrl.u32 %v1277, 7
      %v1279 = vsub.s32 0, %v1278
      %v1280 = vrot.slane %v1275, %v1279
      %v1314 = vunpack.c.l.b16 %v1243
      %v1315 = vunpack.c.l.b16 %v1244
      %v1316 = vunpack.c.l.b16 %v1245
      %v1317 = vunpack.c.l.b16 %v1246
      %v1318 = vunpack.c.l.b16 %v1247
      %v1319 = vunpack.c.l.b16 %v1248
      %v1320 = vunpack.c.l.b16 %v1249
      %v1321 = vunpack.c.l.b16 %v1250
      %v1322 = vunpack.c.l.b16 %v1251
      %v1323 = vunpack.c.l.b16 %v1252
      %v1324 = vunpack.c.l.b16 %v1253
      %v1325 = vunpack.c.l.b16 %v1254
      %v1326 = vunpack.c.l.b16 %v1255
      %v1327 = vunpack.c.l.b16 %v1256
      %v1328 = vunpack.c.l.b16 %v1257
      %v1329 = vunpack.c.l.b16 %v1258
      %v1330 = vunpack.c.l.b16 %v1259
      %v1331 = vunpack.c.l.b16 %v1260
      %v1332 = vunpack.c.l.b16 %v1261
      %v1333 = vunpack.c.l.b16 %v1262
      %v1334 = vunpack.c.l.b16 %v1263
      %v1335 = vunpack.c.l.b16 %v1264
      %v1336 = vunpack.c.l.b16 %v1265
      %v1337 = vunpack.c.l.b16 %v1266
      %v1338 = vunpack.c.l.b16 %v1267
      %v1339 = vunpack.c.l.b16 %v1268
      %v1340 = vunpack.c.l.b16 %v1269
      %v1341 = vunpack.c.l.b16 %v1270
      %v1342 = vunpack.c.l.b16 %v1271
      %v1343 = vunpack.c.l.b16 %v1272
      %v1344 = vunpack.c.l.b16 %v1273
      %v1345 = vunpack.c.l.b16 %v1274
      %v1346 = vpack.c.b16 %v1315, %v1314
      %v1347 = vpack.c.b16 %v1317, %v1316
      %v1348 = vpack.c.b16 %v1319, %v1318
      %v1349 = vpack.c.b16 %v1321, %v1320
      %v1350 = vpack.c.b16 %v1323, %v1322
      %v1351 = vpack.c.b16 %v1325, %v1324
      %v1352 = vpack.c.b16 %v1327, %v1326
      %v1353 = vpack.c.b16 %v1329, %v1328
      %v1354 = vpack.c.b16 %v1331, %v1330
      %v1355 = vpack.c.b16 %v1333, %v1332
      %v1356 = vpack.c.b16 %v1335, %v1334
      %v1357 = vpack.c.b16 %v1337, %v1336
      %v1358 = vpack.c.b16 %v1339, %v1338
      %v1359 = vpack.c.b16 %v1341, %v1340
      %v1360 = vpack.c.b16 %v1343, %v1342
      %v1361 = vpack.c.b16 %v1345, %v1344
      %1378 = vmatprep.subr.bf16.mxu0 0
      %1379 = vmatpush1.bf16.msra.mxu0 %v1346
      %1380 = vmatprep.subr.bf16.mxu0 0
      %1381 = vmatpush1.bf16.msra.mxu0 %v1347
      %1382 = vmatprep.subr.bf16.mxu0 0
      %1383 = vmatpush1.bf16.msra.mxu0 %v1348
      %1384 = vmatprep.subr.bf16.mxu0 0
      %1385 = vmatpush1.bf16.msra.mxu0 %v1349
      %1386 = vmatprep.subr.bf16.mxu0 0
      %1387 = vmatpush1.bf16.msra.mxu0 %v1350
      %1388 = vmatprep.subr.bf16.mxu0 0
      %1389 = vmatpush1.bf16.msra.mxu0 %v1351
      %1390 = vmatprep.subr.bf16.mxu0 0
      %1391 = vmatpush1.bf16.msra.mxu0 %v1352
      %1392 = vmatprep.subr.bf16.mxu0 0
      %1393 = vmatpush1.bf16.msra.mxu0 %v1353
      %1394 = vmatprep.subr.bf16.mxu0 0
      %1395 = vmatpush1.bf16.msra.mxu0 %v1354
      %1396 = vmatprep.subr.bf16.mxu0 0
      %1397 = vmatpush1.bf16.msra.mxu0 %v1355
      %1398 = vmatprep.subr.bf16.mxu0 0
      %1399 = vmatpush1.bf16.msra.mxu0 %v1356
      %1400 = vmatprep.subr.bf16.mxu0 0
      %1401 = vmatpush1.bf16.msra.mxu0 %v1357
      %1402 = vmatprep.subr.bf16.mxu0 0
      %1403 = vmatpush1.bf16.msra.mxu0 %v1358
      %1404 = vmatprep.subr.bf16.mxu0 0
      %1405 = vmatpush1.bf16.msra.mxu0 %v1359
      %1406 = vmatprep.subr.bf16.mxu0 0
      %1407 = vmatpush1.bf16.msra.mxu0 %v1360
      %1408 = vmatprep.subr.bf16.mxu0 0
      %1409 = vmatpush1.bf16.msra.mxu0 %v1361
      %1410 = vmatprep.mubr.bf16.mxu0 %v730
      %1411 = vmatmul.mubr.bf16.gmra.mrb[0].mxu0 %v729
      %v1412 = vpop.f32.mrb[0].mxu0
      %v1413 = vadd.f32 %v1280, %v1412
      %v1414 = vpop.f32.mrb[0].mxu0
      %v1415 = vpop.f32.mrb[0].mxu0
      %v1416 = vadd.f32 %v1280, %v1415
      %v1417 = vpop.f32.mrb[0].mxu0
      %1418 = vmatprep.mubr.bf16.mxu0 %v732
      %1419 = vmatmul.mubr.bf16.gmra.mrb[0].mxu0 %v731
      %v1420 = vpop.f32.mrb[0].mxu0
      %v1421 = vadd.f32 %v1280, %v1420
      %v1422 = vpop.f32.mrb[0].mxu0
      %v1423 = vpop.f32.mrb[0].mxu0
      %v1424 = vadd.f32 %v1280, %v1423
      %v1425 = vpop.f32.mrb[0].mxu0
      %1426 = vmatprep.mubr.bf16.mxu0 %v734
      %1427 = vmatmul.mubr.bf16.gmra.mrb[0].mxu0 %v733
      %v1428 = vpop.f32.mrb[0].mxu0
      %v1429 = vadd.f32 %v1280, %v1428
      %v1430 = vpop.f32.mrb[0].mxu0
      %v1431 = vpop.f32.mrb[0].mxu0
      %v1432 = vadd.f32 %v1280, %v1431
      %v1433 = vpop.f32.mrb[0].mxu0
      %1434 = vmatprep.mubr.bf16.mxu0 %v736
      %1435 = vmatmul.mubr.bf16.gmra.mrb[0].mxu0 %v735
      %v1436 = vpop.f32.mrb[0].mxu0
      %v1437 = vadd.f32 %v1280, %v1436
      %v1438 = vpop.f32.mrb[0].mxu0
      %v1439 = vpop.f32.mrb[0].mxu0
      %v1440 = vadd.f32 %v1280, %v1439
      %v1441 = vpop.f32.mrb[0].mxu0
      %1442 = vmatprep.mubr.bf16.mxu0 %v738
      %1443 = vmatmul.mubr.bf16.gmra.mrb[0].mxu0 %v737
      %v1444 = vpop.f32.mrb[0].mxu0
      %v1445 = vadd.f32 %v1280, %v1444
      %v1446 = vpop.f32.mrb[0].mxu0
      %v1447 = vpop.f32.mrb[0].mxu0
      %v1448 = vadd.f32 %v1280, %v1447
      %v1449 = vpop.f32.mrb[0].mxu0
      %1450 = vmatprep.mubr.bf16.mxu0 %v740
      %1451 = vmatmul.mubr.bf16.gmra.mrb[0].mxu0 %v739
      %v1452 = vpop.f32.mrb[0].mxu0
      %v1453 = vadd.f32 %v1280, %v1452
      %v1454 = vpop.f32.mrb[0].mxu0
      %v1455 = vpop.f32.mrb[0].mxu0
      %v1456 = vadd.f32 %v1280, %v1455
      %v1457 = vpop.f32.mrb[0].mxu0
      %1458 = vmatprep.mubr.bf16.mxu0 %v742
      %1459 = vmatmul.mubr.bf16.gmra.mrb[0].mxu0 %v741
      %v1460 = vpop.f32.mrb[0].mxu0
      %v1461 = vadd.f32 %v1280, %v1460
      %v1462 = vpop.f32.mrb[0].mxu0
      %v1463 = vpop.f32.mrb[0].mxu0
      %v1464 = vadd.f32 %v1280, %v1463
      %v1465 = vpop.f32.mrb[0].mxu0
      %1466 = vmatprep.mubr.bf16.mxu0 %v744
      %1467 = vmatmul.mubr.bf16.gmra.mrb[0].mxu0 %v743
      %v1468 = vpop.f32.mrb[0].mxu0
      %v1469 = vadd.f32 %v1280, %v1468
      %v1470 = vpop.f32.mrb[0].mxu0
      %v1471 = vpop.f32.mrb[0].mxu0
      %v1472 = vadd.f32 %v1280, %v1471
      %v1473 = vpop.f32.mrb[0].mxu0
      %1474 = vmatprep.mubr.bf16.mxu0 %v746
      %1475 = vmatmul.mubr.bf16.gmra.mrb[0].mxu0 %v745
      %v1476 = vpop.f32.mrb[0].mxu0
      %v1477 = vadd.f32 %v1280, %v1476
      %v1478 = vpop.f32.mrb[0].mxu0
      %v1479 = vpop.f32.mrb[0].mxu0
      %v1480 = vadd.f32 %v1280, %v1479
      %v1481 = vpop.f32.mrb[0].mxu0
      %1482 = vmatprep.mubr.bf16.mxu0 %v748
      %1483 = vmatmul.mubr.bf16.gmra.mrb[0].mxu0 %v747
      %v1484 = vpop.f32.mrb[0].mxu0
      %v1485 = vadd.f32 %v1280, %v1484
      %v1486 = vpop.f32.mrb[0].mxu0
      %v1487 = vpop.f32.mrb[0].mxu0
      %v1488 = vadd.f32 %v1280, %v1487
      %v1489 = vpop.f32.mrb[0].mxu0
      %1490 = vmatprep.mubr.bf16.mxu0 %v750
      %1491 = vmatmul.mubr.bf16.gmra.mrb[0].mxu0 %v749
      %v1492 = vpop.f32.mrb[0].mxu0
      %v1493 = vadd.f32 %v1280, %v1492
      %v1494 = vpop.f32.mrb[0].mxu0
      %v1495 = vpop.f32.mrb[0].mxu0
      %v1496 = vadd.f32 %v1280, %v1495
      %v1497 = vpop.f32.mrb[0].mxu0
      %1498 = vmatprep.mubr.bf16.mxu0 %v752
      %1499 = vmatmul.mubr.bf16.gmra.mrb[0].mxu0 %v751
      %v1500 = vpop.f32.mrb[0].mxu0
      %v1501 = vadd.f32 %v1280, %v1500
      %v1502 = vpop.f32.mrb[0].mxu0
      %v1503 = vpop.f32.mrb[0].mxu0
      %v1504 = vadd.f32 %v1280, %v1503
      %v1505 = vpop.f32.mrb[0].mxu0
      %1506 = vmatprep.mubr.bf16.mxu0 %v754
      %1507 = vmatmul.mubr.bf16.gmra.mrb[0].mxu0 %v753
      %v1508 = vpop.f32.mrb[0].mxu0
      %v1509 = vadd.f32 %v1280, %v1508
      %v1510 = vpop.f32.mrb[0].mxu0
      %v1511 = vpop.f32.mrb[0].mxu0
      %v1512 = vadd.f32 %v1280, %v1511
      %v1513 = vpop.f32.mrb[0].mxu0
      %1514 = vmatprep.mubr.bf16.mxu0 %v756
      %1515 = vmatmul.mubr.bf16.gmra.mrb[0].mxu0 %v755
      %v1516 = vpop.f32.mrb[0].mxu0
      %v1517 = vadd.f32 %v1280, %v1516
      %v1518 = vpop.f32.mrb[0].mxu0
      %v1519 = vpop.f32.mrb[0].mxu0
      %v1520 = vadd.f32 %v1280, %v1519
      %v1521 = vpop.f32.mrb[0].mxu0
      %1522 = vmatprep.mubr.bf16.mxu0 %v758
      %1523 = vmatmul.mubr.bf16.gmra.mrb[0].mxu0 %v757
      %v1524 = vpop.f32.mrb[0].mxu0
      %v1525 = vadd.f32 %v1280, %v1524
      %v1526 = vpop.f32.mrb[0].mxu0
      %v1527 = vpop.f32.mrb[0].mxu0
      %v1528 = vadd.f32 %v1280, %v1527
      %v1529 = vpop.f32.mrb[0].mxu0
      %1530 = vmatprep.mubr.bf16.mxu0 %v760
      %1531 = vmatmul.mubr.bf16.gmra.mrb[0].mxu0 %v759
      %v1532 = vpop.f32.mrb[0].mxu0
      %v1533 = vadd.f32 %v1280, %v1532
      %v1534 = vpop.f32.mrb[0].mxu0
      %v1535 = vpop.f32.mrb[0].mxu0
      %v1536 = vadd.f32 %v1280, %v1535
      %v1537 = vpop.f32.mrb[0].mxu0
      %1538 = vdwg.mxu0
      %v1539 = vpack.c.bf16 %v1416, %v1413
      %v1540 = vpack.c.bf16 %v1424, %v1421
      %v1541 = vpack.c.bf16 %v1432, %v1429
      %v1542 = vpack.c.bf16 %v1440, %v1437
      %v1543 = vpack.c.bf16 %v1448, %v1445
      %v1544 = vpack.c.bf16 %v1456, %v1453
      %v1545 = vpack.c.bf16 %v1464, %v1461
      %v1546 = vpack.c.bf16 %v1472, %v1469
      %v1547 = vpack.c.bf16 %v1480, %v1477
      %v1548 = vpack.c.bf16 %v1488, %v1485
      %v1549 = vpack.c.bf16 %v1496, %v1493
      %v1550 = vpack.c.bf16 %v1504, %v1501
      %v1551 = vpack.c.bf16 %v1512, %v1509
      %v1552 = vpack.c.bf16 %v1520, %v1517
      %v1553 = vpack.c.bf16 %v1528, %v1525
      %v1554 = vpack.c.bf16 %v1536, %v1533
      %v1571 = vunpack.c.l.b16 %v1539
      %v1572 = vunpack.c.h.b16 %v1539
      %v1573 = vunpack.c.l.b16 %v1540
      %v1574 = vunpack.c.h.b16 %v1540
      %v1575 = vunpack.c.l.b16 %v1541
      %v1576 = vunpack.c.h.b16 %v1541
      %v1577 = vunpack.c.l.b16 %v1542
      %v1578 = vunpack.c.h.b16 %v1542
      %v1579 = vunpack.c.l.b16 %v1543
      %v1580 = vunpack.c.h.b16 %v1543
      %v1581 = vunpack.c.l.b16 %v1544
      %v1582 = vunpack.c.h.b16 %v1544
      %v1583 = vunpack.c.l.b16 %v1545
      %v1584 = vunpack.c.h.b16 %v1545
      %v1585 = vunpack.c.l.b16 %v1546
      %v1586 = vunpack.c.h.b16 %v1546
      %v1587 = vunpack.c.l.b16 %v1547
      %v1588 = vunpack.c.h.b16 %v1547
      %v1589 = vunpack.c.l.b16 %v1548
      %v1590 = vunpack.c.h.b16 %v1548
      %v1591 = vunpack.c.l.b16 %v1549
      %v1592 = vunpack.c.h.b16 %v1549
      %v1593 = vunpack.c.l.b16 %v1550
      %v1594 = vunpack.c.h.b16 %v1550
      %v1595 = vunpack.c.l.b16 %v1551
      %v1596 = vunpack.c.h.b16 %v1551
      %v1597 = vunpack.c.l.b16 %v1552
      %v1598 = vunpack.c.h.b16 %v1552
      %v1599 = vunpack.c.l.b16 %v1553
      %v1600 = vunpack.c.h.b16 %v1553
      %v1601 = vunpack.c.l.b16 %v1554
      %v1602 = vunpack.c.h.b16 %v1554
      %v1603 = vpack.c.b16 %v1571, %v1571
      %v1604 = vpack.c.b16 %v1572, %v1572
      %v1605 = vpack.c.b16 %v1573, %v1573
      %v1606 = vpack.c.b16 %v1574, %v1574
      %v1607 = vpack.c.b16 %v1575, %v1575
      %v1608 = vpack.c.b16 %v1576, %v1576
      %v1609 = vpack.c.b16 %v1577, %v1577
      %v1610 = vpack.c.b16 %v1578, %v1578
      %v1611 = vpack.c.b16 %v1579, %v1579
      %v1612 = vpack.c.b16 %v1580, %v1580
      %v1613 = vpack.c.b16 %v1581, %v1581
      %v1614 = vpack.c.b16 %v1582, %v1582
      %v1615 = vpack.c.b16 %v1583, %v1583
      %v1616 = vpack.c.b16 %v1584, %v1584
      %v1617 = vpack.c.b16 %v1585, %v1585
      %v1618 = vpack.c.b16 %v1586, %v1586
      %v1619 = vpack.c.b16 %v1587, %v1587
      %v1620 = vpack.c.b16 %v1588, %v1588
      %v1621 = vpack.c.b16 %v1589, %v1589
      %v1622 = vpack.c.b16 %v1590, %v1590
      %v1623 = vpack.c.b16 %v1591, %v1591
      %v1624 = vpack.c.b16 %v1592, %v1592
      %v1625 = vpack.c.b16 %v1593, %v1593
      %v1626 = vpack.c.b16 %v1594, %v1594
      %v1627 = vpack.c.b16 %v1595, %v1595
      %v1628 = vpack.c.b16 %v1596, %v1596
      %v1629 = vpack.c.b16 %v1597, %v1597
      %v1630 = vpack.c.b16 %v1598, %v1598
      %v1631 = vpack.c.b16 %v1599, %v1599
      %v1632 = vpack.c.b16 %v1600, %v1600
      %v1633 = vpack.c.b16 %v1601, %v1601
      %v1634 = vpack.c.b16 %v1602, %v1602
      %1667 = vst.msk [vmem:[%s545] sm:$0xf] %vm1210, %v1603
      %1668 = vst.msk [vmem:[%s545 + $0x4] sm:$0xf] %vm1210, %v1604
      %1669 = vst.msk [vmem:[%s545 + $0x8] sm:$0xf] %vm1210, %v1605
      %1670 = vst.msk [vmem:[%s545 + $0xc] sm:$0xf] %vm1210, %v1606
      %1671 = vst.msk [vmem:[%s545 + $0x10] sm:$0xf] %vm1210, %v1607
      %1672 = vst.msk [vmem:[%s545 + $0x14] sm:$0xf] %vm1210, %v1608
      %1673 = vst.msk [vmem:[%s545 + $0x18] sm:$0xf] %vm1210, %v1609
      %1674 = vst.msk [vmem:[%s545 + $0x1c] sm:$0xf] %vm1210, %v1610
      %1675 = vst.msk [vmem:[%s545 + $0x20] sm:$0xf] %vm1210, %v1611
      %1676 = vst.msk [vmem:[%s545 + $0x24] sm:$0xf] %vm1210, %v1612
      %1677 = vst.msk [vmem:[%s545 + $0x28] sm:$0xf] %vm1210, %v1613
      %1678 = vst.msk [vmem:[%s545 + $0x2c] sm:$0xf] %vm1210, %v1614
      %1679 = vst.msk [vmem:[%s545 + $0x30] sm:$0xf] %vm1210, %v1615
      %1680 = vst.msk [vmem:[%s545 + $0x34] sm:$0xf] %vm1210, %v1616
      %1681 = vst.msk [vmem:[%s545 + $0x38] sm:$0xf] %vm1210, %v1617
      %1682 = vst.msk [vmem:[%s545 + $0x3c] sm:$0xf] %vm1210, %v1618
      %1683 = vst.msk [vmem:[%s545 + $0x40] sm:$0xf] %vm1210, %v1619
      %1684 = vst.msk [vmem:[%s545 + $0x44] sm:$0xf] %vm1210, %v1620
      %1685 = vst.msk [vmem:[%s545 + $0x48] sm:$0xf] %vm1210, %v1621
      %1686 = vst.msk [vmem:[%s545 + $0x4c] sm:$0xf] %vm1210, %v1622
      %1687 = vst.msk [vmem:[%s545 + $0x50] sm:$0xf] %vm1210, %v1623
      %1688 = vst.msk [vmem:[%s545 + $0x54] sm:$0xf] %vm1210, %v1624
      %1689 = vst.msk [vmem:[%s545 + $0x58] sm:$0xf] %vm1210, %v1625
      %1690 = vst.msk [vmem:[%s545 + $0x5c] sm:$0xf] %vm1210, %v1626
      %1691 = vst.msk [vmem:[%s545 + $0x60] sm:$0xf] %vm1210, %v1627
      %1692 = vst.msk [vmem:[%s545 + $0x64] sm:$0xf] %vm1210, %v1628
      %1693 = vst.msk [vmem:[%s545 + $0x68] sm:$0xf] %vm1210, %v1629
      %1694 = vst.msk [vmem:[%s545 + $0x6c] sm:$0xf] %vm1210, %v1630
      %1695 = vst.msk [vmem:[%s545 + $0x70] sm:$0xf] %vm1210, %v1631
      %1696 = vst.msk [vmem:[%s545 + $0x74] sm:$0xf] %vm1210, %v1632
      %1697 = vst.msk [vmem:[%s545 + $0x78] sm:$0xf] %vm1210, %v1633
      %1698 = vst.msk [vmem:[%s545 + $0x7c] sm:$0xf] %vm1210, %v1634
      %v1699 = vld [vmem:[%s509] sm:$0xf]
      %v1700 = vld [vmem:[%s509 + $0x4] sm:$0xf]
      %v1701 = vld [vmem:[%s509 + $0x8] sm:$0xf]
      %v1702 = vld [vmem:[%s509 + $0xc] sm:$0xf]
      %v1703 = vld [vmem:[%s509 + $0x10] sm:$0xf]
      %v1704 = vld [vmem:[%s509 + $0x14] sm:$0xf]
      %v1705 = vld [vmem:[%s509 + $0x18] sm:$0xf]
      %v1706 = vld [vmem:[%s509 + $0x1c] sm:$0xf]
      %v1707 = vld [vmem:[%s509 + $0x20] sm:$0xf]
      %v1708 = vld [vmem:[%s509 + $0x24] sm:$0xf]
      %v1709 = vld [vmem:[%s509 + $0x28] sm:$0xf]
      %v1710 = vld [vmem:[%s509 + $0x2c] sm:$0xf]
      %v1711 = vld [vmem:[%s509 + $0x30] sm:$0xf]
      %v1712 = vld [vmem:[%s509 + $0x34] sm:$0xf]
      %v1713 = vld [vmem:[%s509 + $0x38] sm:$0xf]
      %v1714 = vld [vmem:[%s509 + $0x3c] sm:$0xf]
      %v1715 = vld [vmem:[%s509 + $0x40] sm:$0xf]
      %v1716 = vld [vmem:[%s509 + $0x44] sm:$0xf]
      %v1717 = vld [vmem:[%s509 + $0x48] sm:$0xf]
      %v1718 = vld [vmem:[%s509 + $0x4c] sm:$0xf]
      %v1719 = vld [vmem:[%s509 + $0x50] sm:$0xf]
      %v1720 = vld [vmem:[%s509 + $0x54] sm:$0xf]
      %v1721 = vld [vmem:[%s509 + $0x58] sm:$0xf]
      %v1722 = vld [vmem:[%s509 + $0x5c] sm:$0xf]
      %v1723 = vld [vmem:[%s509 + $0x60] sm:$0xf]
      %v1724 = vld [vmem:[%s509 + $0x64] sm:$0xf]
      %v1725 = vld [vmem:[%s509 + $0x68] sm:$0xf]
      %v1726 = vld [vmem:[%s509 + $0x6c] sm:$0xf]
      %v1727 = vld [vmem:[%s509 + $0x70] sm:$0xf]
      %v1728 = vld [vmem:[%s509 + $0x74] sm:$0xf]
      %v1729 = vld [vmem:[%s509 + $0x78] sm:$0xf]
      %v1730 = vld [vmem:[%s509 + $0x7c] sm:$0xf]
      %v1731 = vld [vmem:[%s518] sm:$0x1]
      %v1733 = vlaneseq
      %v1734 = vshrl.u32 %v1733, 7
      %v1735 = vsub.s32 0, %v1734
      %v1736 = vrot.slane %v1731, %v1735
      %v1770 = vunpack.c.l.b16 %v1699
      %v1771 = vunpack.c.l.b16 %v1700
      %v1772 = vunpack.c.l.b16 %v1701
      %v1773 = vunpack.c.l.b16 %v1702
      %v1774 = vunpack.c.l.b16 %v1703
      %v1775 = vunpack.c.l.b16 %v1704
      %v1776 = vunpack.c.l.b16 %v1705
      %v1777 = vunpack.c.l.b16 %v1706
      %v1778 = vunpack.c.l.b16 %v1707
      %v1779 = vunpack.c.l.b16 %v1708
      %v1780 = vunpack.c.l.b16 %v1709
      %v1781 = vunpack.c.l.b16 %v1710
      %v1782 = vunpack.c.l.b16 %v1711
      %v1783 = vunpack.c.l.b16 %v1712
      %v1784 = vunpack.c.l.b16 %v1713
      %v1785 = vunpack.c.l.b16 %v1714
      %v1786 = vunpack.c.l.b16 %v1715
      %v1787 = vunpack.c.l.b16 %v1716
      %v1788 = vunpack.c.l.b16 %v1717
      %v1789 = vunpack.c.l.b16 %v1718
      %v1790 = vunpack.c.l.b16 %v1719
      %v1791 = vunpack.c.l.b16 %v1720
      %v1792 = vunpack.c.l.b16 %v1721
      %v1793 = vunpack.c.l.b16 %v1722
      %v1794 = vunpack.c.l.b16 %v1723
      %v1795 = vunpack.c.l.b16 %v1724
      %v1796 = vunpack.c.l.b16 %v1725
      %v1797 = vunpack.c.l.b16 %v1726
      %v1798 = vunpack.c.l.b16 %v1727
      %v1799 = vunpack.c.l.b16 %v1728
      %v1800 = vunpack.c.l.b16 %v1729
      %v1801 = vunpack.c.l.b16 %v1730
      %v1802 = vpack.c.b16 %v1771, %v1770
      %v1803 = vpack.c.b16 %v1773, %v1772
      %v1804 = vpack.c.b16 %v1775, %v1774
      %v1805 = vpack.c.b16 %v1777, %v1776
      %v1806 = vpack.c.b16 %v1779, %v1778
      %v1807 = vpack.c.b16 %v1781, %v1780
      %v1808 = vpack.c.b16 %v1783, %v1782
      %v1809 = vpack.c.b16 %v1785, %v1784
      %v1810 = vpack.c.b16 %v1787, %v1786
      %v1811 = vpack.c.b16 %v1789, %v1788
      %v1812 = vpack.c.b16 %v1791, %v1790
      %v1813 = vpack.c.b16 %v1793, %v1792
      %v1814 = vpack.c.b16 %v1795, %v1794
      %v1815 = vpack.c.b16 %v1797, %v1796
      %v1816 = vpack.c.b16 %v1799, %v1798
      %v1817 = vpack.c.b16 %v1801, %v1800
      %1834 = vmatprep.subr.bf16.mxu0 0
      %1835 = vmatpush1.bf16.msra.mxu0 %v1802
      %1836 = vmatprep.subr.bf16.mxu0 0
      %1837 = vmatpush1.bf16.msra.mxu0 %v1803
      %1838 = vmatprep.subr.bf16.mxu0 0
      %1839 = vmatpush1.bf16.msra.mxu0 %v1804
      %1840 = vmatprep.subr.bf16.mxu0 0
      %1841 = vmatpush1.bf16.msra.mxu0 %v1805
      %1842 = vmatprep.subr.bf16.mxu0 0
      %1843 = vmatpush1.bf16.msra.mxu0 %v1806
      %1844 = vmatprep.subr.bf16.mxu0 0
      %1845 = vmatpush1.bf16.msra.mxu0 %v1807
      %1846 = vmatprep.subr.bf16.mxu0 0
      %1847 = vmatpush1.bf16.msra.mxu0 %v1808
      %1848 = vmatprep.subr.bf16.mxu0 0
      %1849 = vmatpush1.bf16.msra.mxu0 %v1809
      %1850 = vmatprep.subr.bf16.mxu0 0
      %1851 = vmatpush1.bf16.msra.mxu0 %v1810
      %1852 = vmatprep.subr.bf16.mxu0 0
      %1853 = vmatpush1.bf16.msra.mxu0 %v1811
      %1854 = vmatprep.subr.bf16.mxu0 0
      %1855 = vmatpush1.bf16.msra.mxu0 %v1812
      %1856 = vmatprep.subr.bf16.mxu0 0
      %1857 = vmatpush1.bf16.msra.mxu0 %v1813
      %1858 = vmatprep.subr.bf16.mxu0 0
      %1859 = vmatpush1.bf16.msra.mxu0 %v1814
      %1860 = vmatprep.subr.bf16.mxu0 0
      %1861 = vmatpush1.bf16.msra.mxu0 %v1815
      %1862 = vmatprep.subr.bf16.mxu0 0
      %1863 = vmatpush1.bf16.msra.mxu0 %v1816
      %1864 = vmatprep.subr.bf16.mxu0 0
      %1865 = vmatpush1.bf16.msra.mxu0 %v1817
      %1866 = vmatprep.mubr.bf16.mxu0 %v730
      %1867 = vmatmul.mubr.bf16.gmra.mrb[0].mxu0 %v729
      %v1868 = vpop.f32.mrb[0].mxu0
      %v1869 = vadd.f32 %v1736, %v1868
      %v1870 = vpop.f32.mrb[0].mxu0
      %v1871 = vpop.f32.mrb[0].mxu0
      %v1872 = vadd.f32 %v1736, %v1871
      %v1873 = vpop.f32.mrb[0].mxu0
      %1874 = vmatprep.mubr.bf16.mxu0 %v732
      %1875 = vmatmul.mubr.bf16.gmra.mrb[0].mxu0 %v731
      %v1876 = vpop.f32.mrb[0].mxu0
      %v1877 = vadd.f32 %v1736, %v1876
      %v1878 = vpop.f32.mrb[0].mxu0
      %v1879 = vpop.f32.mrb[0].mxu0
      %v1880 = vadd.f32 %v1736, %v1879
      %v1881 = vpop.f32.mrb[0].mxu0
      %1882 = vmatprep.mubr.bf16.mxu0 %v734
      %1883 = vmatmul.mubr.bf16.gmra.mrb[0].mxu0 %v733
      %v1884 = vpop.f32.mrb[0].mxu0
      %v1885 = vadd.f32 %v1736, %v1884
      %v1886 = vpop.f32.mrb[0].mxu0
      %v1887 = vpop.f32.mrb[0].mxu0
      %v1888 = vadd.f32 %v1736, %v1887
      %v1889 = vpop.f32.mrb[0].mxu0
      %1890 = vmatprep.mubr.bf16.mxu0 %v736
      %1891 = vmatmul.mubr.bf16.gmra.mrb[0].mxu0 %v735
      %v1892 = vpop.f32.mrb[0].mxu0
      %v1893 = vadd.f32 %v1736, %v1892
      %v1894 = vpop.f32.mrb[0].mxu0
      %v1895 = vpop.f32.mrb[0].mxu0
      %v1896 = vadd.f32 %v1736, %v1895
      %v1897 = vpop.f32.mrb[0].mxu0
      %1898 = vmatprep.mubr.bf16.mxu0 %v738
      %1899 = vmatmul.mubr.bf16.gmra.mrb[0].mxu0 %v737
      %v1900 = vpop.f32.mrb[0].mxu0
      %v1901 = vadd.f32 %v1736, %v1900
      %v1902 = vpop.f32.mrb[0].mxu0
      %v1903 = vpop.f32.mrb[0].mxu0
      %v1904 = vadd.f32 %v1736, %v1903
      %v1905 = vpop.f32.mrb[0].mxu0
      %1906 = vmatprep.mubr.bf16.mxu0 %v740
      %1907 = vmatmul.mubr.bf16.gmra.mrb[0].mxu0 %v739
      %v1908 = vpop.f32.mrb[0].mxu0
      %v1909 = vadd.f32 %v1736, %v1908
      %v1910 = vpop.f32.mrb[0].mxu0
      %v1911 = vpop.f32.mrb[0].mxu0
      %v1912 = vadd.f32 %v1736, %v1911
      %v1913 = vpop.f32.mrb[0].mxu0
      %1914 = vmatprep.mubr.bf16.mxu0 %v742
      %1915 = vmatmul.mubr.bf16.gmra.mrb[0].mxu0 %v741
      %v1916 = vpop.f32.mrb[0].mxu0
      %v1917 = vadd.f32 %v1736, %v1916
      %v1918 = vpop.f32.mrb[0].mxu0
      %v1919 = vpop.f32.mrb[0].mxu0
      %v1920 = vadd.f32 %v1736, %v1919
      %v1921 = vpop.f32.mrb[0].mxu0
      %1922 = vmatprep.mubr.bf16.mxu0 %v744
      %1923 = vmatmul.mubr.bf16.gmra.mrb[0].mxu0 %v743
      %v1924 = vpop.f32.mrb[0].mxu0
      %v1925 = vadd.f32 %v1736, %v1924
      %v1926 = vpop.f32.mrb[0].mxu0
      %v1927 = vpop.f32.mrb[0].mxu0
      %v1928 = vadd.f32 %v1736, %v1927
      %v1929 = vpop.f32.mrb[0].mxu0
      %1930 = vmatprep.mubr.bf16.mxu0 %v746
      %1931 = vmatmul.mubr.bf16.gmra.mrb[0].mxu0 %v745
      %v1932 = vpop.f32.mrb[0].mxu0
      %v1933 = vadd.f32 %v1736, %v1932
      %v1934 = vpop.f32.mrb[0].mxu0
      %v1935 = vpop.f32.mrb[0].mxu0
      %v1936 = vadd.f32 %v1736, %v1935
      %v1937 = vpop.f32.mrb[0].mxu0
      %1938 = vmatprep.mubr.bf16.mxu0 %v748
      %1939 = vmatmul.mubr.bf16.gmra.mrb[0].mxu0 %v747
      %v1940 = vpop.f32.mrb[0].mxu0
      %v1941 = vadd.f32 %v1736, %v1940
      %v1942 = vpop.f32.mrb[0].mxu0
      %v1943 = vpop.f32.mrb[0].mxu0
      %v1944 = vadd.f32 %v1736, %v1943
      %v1945 = vpop.f32.mrb[0].mxu0
      %1946 = vmatprep.mubr.bf16.mxu0 %v750
      %1947 = vmatmul.mubr.bf16.gmra.mrb[0].mxu0 %v749
      %v1948 = vpop.f32.mrb[0].mxu0
      %v1949 = vadd.f32 %v1736, %v1948
      %v1950 = vpop.f32.mrb[0].mxu0
      %v1951 = vpop.f32.mrb[0].mxu0
      %v1952 = vadd.f32 %v1736, %v1951
      %v1953 = vpop.f32.mrb[0].mxu0
      %1954 = vmatprep.mubr.bf16.mxu0 %v752
      %1955 = vmatmul.mubr.bf16.gmra.mrb[0].mxu0 %v751
      %v1956 = vpop.f32.mrb[0].mxu0
      %v1957 = vadd.f32 %v1736, %v1956
      %v1958 = vpop.f32.mrb[0].mxu0
      %v1959 = vpop.f32.mrb[0].mxu0
      %v1960 = vadd.f32 %v1736, %v1959
      %v1961 = vpop.f32.mrb[0].mxu0
      %1962 = vmatprep.mubr.bf16.mxu0 %v754
      %1963 = vmatmul.mubr.bf16.gmra.mrb[0].mxu0 %v753
      %v1964 = vpop.f32.mrb[0].mxu0
      %v1965 = vadd.f32 %v1736, %v1964
      %v1966 = vpop.f32.mrb[0].mxu0
      %v1967 = vpop.f32.mrb[0].mxu0
      %v1968 = vadd.f32 %v1736, %v1967
      %v1969 = vpop.f32.mrb[0].mxu0
      %1970 = vmatprep.mubr.bf16.mxu0 %v756
      %1971 = vmatmul.mubr.bf16.gmra.mrb[0].mxu0 %v755
      %v1972 = vpop.f32.mrb[0].mxu0
      %v1973 = vadd.f32 %v1736, %v1972
      %v1974 = vpop.f32.mrb[0].mxu0
      %v1975 = vpop.f32.mrb[0].mxu0
      %v1976 = vadd.f32 %v1736, %v1975
      %v1977 = vpop.f32.mrb[0].mxu0
      %1978 = vmatprep.mubr.bf16.mxu0 %v758
      %1979 = vmatmul.mubr.bf16.gmra.mrb[0].mxu0 %v757
      %v1980 = vpop.f32.mrb[0].mxu0
      %v1981 = vadd.f32 %v1736, %v1980
      %v1982 = vpop.f32.mrb[0].mxu0
      %v1983 = vpop.f32.mrb[0].mxu0
      %v1984 = vadd.f32 %v1736, %v1983
      %v1985 = vpop.f32.mrb[0].mxu0
      %1986 = vmatprep.mubr.bf16.mxu0 %v760
      %1987 = vmatmul.mubr.bf16.gmra.mrb[0].mxu0 %v759
      %v1988 = vpop.f32.mrb[0].mxu0
      %v1989 = vadd.f32 %v1736, %v1988
      %v1990 = vpop.f32.mrb[0].mxu0
      %v1991 = vpop.f32.mrb[0].mxu0
      %v1992 = vadd.f32 %v1736, %v1991
      %v1993 = vpop.f32.mrb[0].mxu0
      %1994 = vdwg.mxu0
      %v1995 = vpack.c.bf16 %v1872, %v1869
      %v1996 = vpack.c.bf16 %v1880, %v1877
      %v1997 = vpack.c.bf16 %v1888, %v1885
      %v1998 = vpack.c.bf16 %v1896, %v1893
      %v1999 = vpack.c.bf16 %v1904, %v1901
      %v2000 = vpack.c.bf16 %v1912, %v1909
      %v2001 = vpack.c.bf16 %v1920, %v1917
      %v2002 = vpack.c.bf16 %v1928, %v1925
      %v2003 = vpack.c.bf16 %v1936, %v1933
      %v2004 = vpack.c.bf16 %v1944, %v1941
      %v2005 = vpack.c.bf16 %v1952, %v1949
      %v2006 = vpack.c.bf16 %v1960, %v1957
      %v2007 = vpack.c.bf16 %v1968, %v1965
      %v2008 = vpack.c.bf16 %v1976, %v1973
      %v2009 = vpack.c.bf16 %v1984, %v1981
      %v2010 = vpack.c.bf16 %v1992, %v1989
      %v2027 = vunpack.c.l.b16 %v1995
      %v2028 = vunpack.c.h.b16 %v1995
      %v2029 = vunpack.c.l.b16 %v1996
      %v2030 = vunpack.c.h.b16 %v1996
      %v2031 = vunpack.c.l.b16 %v1997
      %v2032 = vunpack.c.h.b16 %v1997
      %v2033 = vunpack.c.l.b16 %v1998
      %v2034 = vunpack.c.h.b16 %v1998
      %v2035 = vunpack.c.l.b16 %v1999
      %v2036 = vunpack.c.h.b16 %v1999
      %v2037 = vunpack.c.l.b16 %v2000
      %v2038 = vunpack.c.h.b16 %v2000
      %v2039 = vunpack.c.l.b16 %v2001
      %v2040 = vunpack.c.h.b16 %v2001
      %v2041 = vunpack.c.l.b16 %v2002
      %v2042 = vunpack.c.h.b16 %v2002
      %v2043 = vunpack.c.l.b16 %v2003
      %v2044 = vunpack.c.h.b16 %v2003
      %v2045 = vunpack.c.l.b16 %v2004
      %v2046 = vunpack.c.h.b16 %v2004
      %v2047 = vunpack.c.l.b16 %v2005
      %v2048 = vunpack.c.h.b16 %v2005
      %v2049 = vunpack.c.l.b16 %v2006
      %v2050 = vunpack.c.h.b16 %v2006
      %v2051 = vunpack.c.l.b16 %v2007
      %v2052 = vunpack.c.h.b16 %v2007
      %v2053 = vunpack.c.l.b16 %v2008
      %v2054 = vunpack.c.h.b16 %v2008
      %v2055 = vunpack.c.l.b16 %v2009
      %v2056 = vunpack.c.h.b16 %v2009
      %v2057 = vunpack.c.l.b16 %v2010
      %v2058 = vunpack.c.h.b16 %v2010
      %v2059 = vpack.c.b16 %v2027, %v2027
      %v2060 = vpack.c.b16 %v2028, %v2028
      %v2061 = vpack.c.b16 %v2029, %v2029
      %v2062 = vpack.c.b16 %v2030, %v2030
      %v2063 = vpack.c.b16 %v2031, %v2031
      %v2064 = vpack.c.b16 %v2032, %v2032
      %v2065 = vpack.c.b16 %v2033, %v2033
      %v2066 = vpack.c.b16 %v2034, %v2034
      %v2067 = vpack.c.b16 %v2035, %v2035
      %v2068 = vpack.c.b16 %v2036, %v2036
      %v2069 = vpack.c.b16 %v2037, %v2037
      %v2070 = vpack.c.b16 %v2038, %v2038
      %v2071 = vpack.c.b16 %v2039, %v2039
      %v2072 = vpack.c.b16 %v2040, %v2040
      %v2073 = vpack.c.b16 %v2041, %v2041
      %v2074 = vpack.c.b16 %v2042, %v2042
      %v2075 = vpack.c.b16 %v2043, %v2043
      %v2076 = vpack.c.b16 %v2044, %v2044
      %v2077 = vpack.c.b16 %v2045, %v2045
      %v2078 = vpack.c.b16 %v2046, %v2046
      %v2079 = vpack.c.b16 %v2047, %v2047
      %v2080 = vpack.c.b16 %v2048, %v2048
      %v2081 = vpack.c.b16 %v2049, %v2049
      %v2082 = vpack.c.b16 %v2050, %v2050
      %v2083 = vpack.c.b16 %v2051, %v2051
      %v2084 = vpack.c.b16 %v2052, %v2052
      %v2085 = vpack.c.b16 %v2053, %v2053
      %v2086 = vpack.c.b16 %v2054, %v2054
      %v2087 = vpack.c.b16 %v2055, %v2055
      %v2088 = vpack.c.b16 %v2056, %v2056
      %v2089 = vpack.c.b16 %v2057, %v2057
      %v2090 = vpack.c.b16 %v2058, %v2058
      %2123 = vst.msk [vmem:[%s559] sm:$0xf] %vm1210, %v2059
      %2124 = vst.msk [vmem:[%s559 + $0x4] sm:$0xf] %vm1210, %v2060
      %2125 = vst.msk [vmem:[%s559 + $0x8] sm:$0xf] %vm1210, %v2061
      %2126 = vst.msk [vmem:[%s559 + $0xc] sm:$0xf] %vm1210, %v2062
      %2127 = vst.msk [vmem:[%s559 + $0x10] sm:$0xf] %vm1210, %v2063
      %2128 = vst.msk [vmem:[%s559 + $0x14] sm:$0xf] %vm1210, %v2064
      %2129 = vst.msk [vmem:[%s559 + $0x18] sm:$0xf] %vm1210, %v2065
      %2130 = vst.msk [vmem:[%s559 + $0x1c] sm:$0xf] %vm1210, %v2066
      %2131 = vst.msk [vmem:[%s559 + $0x20] sm:$0xf] %vm1210, %v2067
      %2132 = vst.msk [vmem:[%s559 + $0x24] sm:$0xf] %vm1210, %v2068
      %2133 = vst.msk [vmem:[%s559 + $0x28] sm:$0xf] %vm1210, %v2069
      %2134 = vst.msk [vmem:[%s559 + $0x2c] sm:$0xf] %vm1210, %v2070
      %2135 = vst.msk [vmem:[%s559 + $0x30] sm:$0xf] %vm1210, %v2071
      %2136 = vst.msk [vmem:[%s559 + $0x34] sm:$0xf] %vm1210, %v2072
      %2137 = vst.msk [vmem:[%s559 + $0x38] sm:$0xf] %vm1210, %v2073
      %2138 = vst.msk [vmem:[%s559 + $0x3c] sm:$0xf] %vm1210, %v2074
      %2139 = vst.msk [vmem:[%s559 + $0x40] sm:$0xf] %vm1210, %v2075
      %2140 = vst.msk [vmem:[%s559 + $0x44] sm:$0xf] %vm1210, %v2076
      %2141 = vst.msk [vmem:[%s559 + $0x48] sm:$0xf] %vm1210, %v2077
      %2142 = vst.msk [vmem:[%s559 + $0x4c] sm:$0xf] %vm1210, %v2078
      %2143 = vst.msk [vmem:[%s559 + $0x50] sm:$0xf] %vm1210, %v2079
      %2144 = vst.msk [vmem:[%s559 + $0x54] sm:$0xf] %vm1210, %v2080
      %2145 = vst.msk [vmem:[%s559 + $0x58] sm:$0xf] %vm1210, %v2081
      %2146 = vst.msk [vmem:[%s559 + $0x5c] sm:$0xf] %vm1210, %v2082
      %2147 = vst.msk [vmem:[%s559 + $0x60] sm:$0xf] %vm1210, %v2083
      %2148 = vst.msk [vmem:[%s559 + $0x64] sm:$0xf] %vm1210, %v2084
      %2149 = vst.msk [vmem:[%s559 + $0x68] sm:$0xf] %vm1210, %v2085
      %2150 = vst.msk [vmem:[%s559 + $0x6c] sm:$0xf] %vm1210, %v2086
      %2151 = vst.msk [vmem:[%s559 + $0x70] sm:$0xf] %vm1210, %v2087
      %2152 = vst.msk [vmem:[%s559 + $0x74] sm:$0xf] %vm1210, %v2088
      %2153 = vst.msk [vmem:[%s559 + $0x78] sm:$0xf] %vm1210, %v2089
      %2154 = vst.msk [vmem:[%s559 + $0x7c] sm:$0xf] %vm1210, %v2090
      %s2155 = smul.u32 32, %s27
      %p2156 = scmp.lt.s32.totalorder %s26, 1
      %s2157 = scalar_select %p2156, %s26, 1
      %p2158 = scmp.lt.s32.totalorder %s28, 7
      %s2159 = scalar_select %p2158, %s28, 7
      %p2160 = scmp.lt.s32.totalorder %s2155, 31
      %s2161 = scalar_select %p2160, %s2155, 31
      %s2162 = smul.addr %s2159, 32
      %s2163 = sadd.s32 %s2161, %s2162
      %s2164 = smul.addr %s2157, 256
      %s2165 = sadd.s32 %s2163, %s2164
      %s2166 = smul.addr %s2165, 4
      %s2167 = scalar_lea.vmem %s7, %s2166
      %s2168 = smul.u32 32, %s27
      %p2169 = scmp.lt.s32.totalorder %s26, 1
      %s2170 = scalar_select %p2169, %s26, 1
      %p2171 = scmp.lt.s32.totalorder %s28, 7
      %s2172 = scalar_select %p2171, %s28, 7
      %p2173 = scmp.lt.s32.totalorder %s2168, 31
      %s2174 = scalar_select %p2173, %s2168, 31
      %s2175 = smul.addr %s2172, 32
      %s2176 = sadd.s32 %s2174, %s2175
      %s2177 = smul.addr %s2170, 256
      %s2178 = sadd.s32 %s2176, %s2177
      %s2179 = smul.addr %s2178, 4
      %s2180 = scalar_lea.vmem %s8, %s2179
      %s2181 = smul.u32 32, %s27
      %p2182 = scmp.lt.s32.totalorder %s26, 1
      %s2183 = scalar_select %p2182, %s26, 1
      %p2184 = scmp.lt.s32.totalorder %s28, 7
      %s2185 = scalar_select %p2184, %s28, 7
      %p2186 = scmp.lt.s32.totalorder %s2181, 31
      %s2187 = scalar_select %p2186, %s2181, 31
      %s2188 = smul.addr %s2185, 32
      %s2189 = sadd.s32 %s2187, %s2188
      %s2190 = smul.addr %s2183, 256
      %s2191 = sadd.s32 %s2189, %s2190
      %s2192 = smul.addr %s2191, 4
      %s2193 = scalar_lea.vmem %s9, %s2192
      // Predicated region
      $region49: #{tpu_custom_call.1} parent=47 // pred_check
        %p2194 = pneg %p246
      $region50: #{tpu_custom_call.1} parent=47 // pred_check_branch
        %2196 = sbr.rel (%p2194) target = $region52
      $region51: #{tpu_custom_call.1} parent=47 // pred_region
        %s2197 = smul.u32 32, %s27
      $region52: #{tpu_custom_call.1} parent=47 // pred_fallthru
        _
      // Predicated region
      $region53: #{tpu_custom_call.1} parent=47 // pred_check
        %p2198 = pneg %p276
      $region54: #{tpu_custom_call.1} parent=47 // pred_check_branch
        %2200 = sbr.rel (%p2198) target = $region56
      $region55: #{tpu_custom_call.1} parent=47 // pred_region
        %s2201 = smul.u32 32, %s27
      $region56: #{tpu_custom_call.1} parent=47 // pred_fallthru
        _
      // Predicated region
      $region57: #{tpu_custom_call.1} parent=47 // pred_check
        %p2202 = pneg %p306
      $region58: #{tpu_custom_call.1} parent=47 // pred_check_branch
        %2204 = sbr.rel (%p2202) target = $region60
      $region59: #{tpu_custom_call.1} parent=47 // pred_region
        %s2205 = smul.u32 32, %s27
      $region60: #{tpu_custom_call.1} parent=47 // pred_fallthru
        _
    $region48: #{tpu_custom_call.1} parent=5 // pred_fallthru
      _
    %p2206 = scmp.le.s32.totalorder 2, %s16
    // Predicated region
    $region61: #{tpu_custom_call.1} parent=5 // pred_check
      %p2207 = pneg %p2206
    $region62: #{tpu_custom_call.1} parent=5 // pred_check_branch
      %2209 = sbr.rel (%p2207) target = $region64
    $region63: #{tpu_custom_call.1} parent=5 // pred_region
      %s2210 = ssub.s32 %s16, 2
      // Predicated region
      $region65: #{tpu_custom_call.1} parent=63 // pred_check
        %p2211 = pneg %p252
      $region66: #{tpu_custom_call.1} parent=63 // pred_check_branch
        %2213 = sbr.rel (%p2211) target = $region68
      $region67: #{tpu_custom_call.1} parent=63 // pred_region
        %s2214 = smul.u32 32, %s30
        %p2215 = scmp.lt.s32.totalorder %s29, 1
        %s2216 = scalar_select %p2215, %s29, 1
        %p2217 = scmp.lt.s32.totalorder %s31, 7
        %s2218 = scalar_select %p2217, %s31, 7
        %p2219 = scmp.lt.s32.totalorder %s2214, 31
        %s2220 = scalar_select %p2219, %s2214, 31
        %s2221 = smul.addr %s2218, 32
        %s2222 = sadd.s32 %s2220, %s2221
        %s2223 = smul.addr %s2216, 256
        %s2224 = sadd.s32 %s2222, %s2223
        %s2225 = smul.addr %s2224, 4
        %s2226 = scalar_lea.vmem %s7, %s2225
      $region68: #{tpu_custom_call.1} parent=63 // pred_fallthru
        _
      // Predicated region
      $region69: #{tpu_custom_call.1} parent=63 // pred_check
        %p2227 = pneg %p282
      $region70: #{tpu_custom_call.1} parent=63 // pred_check_branch
        %2229 = sbr.rel (%p2227) target = $region72
      $region71: #{tpu_custom_call.1} parent=63 // pred_region
        %s2230 = smul.u32 32, %s30
        %p2231 = scmp.lt.s32.totalorder %s29, 1
        %s2232 = scalar_select %p2231, %s29, 1
        %p2233 = scmp.lt.s32.totalorder %s31, 7
        %s2234 = scalar_select %p2233, %s31, 7
        %p2235 = scmp.lt.s32.totalorder %s2230, 31
        %s2236 = scalar_select %p2235, %s2230, 31
        %s2237 = smul.addr %s2234, 32
        %s2238 = sadd.s32 %s2236, %s2237
        %s2239 = smul.addr %s2232, 256
        %s2240 = sadd.s32 %s2238, %s2239
        %s2241 = smul.addr %s2240, 4
        %s2242 = scalar_lea.vmem %s8, %s2241
      $region72: #{tpu_custom_call.1} parent=63 // pred_fallthru
        _
      // Predicated region
      $region73: #{tpu_custom_call.1} parent=63 // pred_check
        %p2243 = pneg %p312
      $region74: #{tpu_custom_call.1} parent=63 // pred_check_branch
        %2245 = sbr.rel (%p2243) target = $region76
      $region75: #{tpu_custom_call.1} parent=63 // pred_region
        %s2246 = smul.u32 32, %s30
        %p2247 = scmp.lt.s32.totalorder %s29, 1
        %s2248 = scalar_select %p2247, %s29, 1
        %p2249 = scmp.lt.s32.totalorder %s31, 7
        %s2250 = scalar_select %p2249, %s31, 7
        %p2251 = scmp.lt.s32.totalorder %s2246, 31
        %s2252 = scalar_select %p2251, %s2246, 31
        %s2253 = smul.addr %s2250, 32
        %s2254 = sadd.s32 %s2252, %s2253
        %s2255 = smul.addr %s2248, 256
        %s2256 = sadd.s32 %s2254, %s2255
        %s2257 = smul.addr %s2256, 4
        %s2258 = scalar_lea.vmem %s9, %s2257
      $region76: #{tpu_custom_call.1} parent=63 // pred_fallthru
        _
    $region64: #{tpu_custom_call.1} parent=5 // pred_fallthru
      _
  $region6: #{tpu_custom_call.1} parent=0 // loop_footer
    %s20 = sadd.s32 1, %s16
  $region7: #{tpu_custom_call.1} parent=0 // loop_footer_branch
    %15 = sbr.rel target = $region3
  $region8: #{tpu_custom_call.1} parent=0 // loop_exit
    _

</llo_original>
